<compile_context>
chip_gen: v5e
topology: v5e:2x2
jax: 0.10.0
libtpu: 0.0.40
codegen_flags: <defaults>
</compile_context>

<pallas_src>
import functools
import math

import jax
import jax.numpy as jnp
from jax import lax
from jax.experimental import pallas as pl
from jax.experimental.pallas import tpu as pltpu


def _round_up(x, m):
    return ((x + m - 1) // m) * m


def _sigmoid_tanh(x):
    # sigmoid(x) == 0.5 * (1 + tanh(x/2)): one EUP push instead of exp + recip.
    return 0.5 * (jnp.tanh(0.5 * x) + 1.0)


def _resident_spec(shape):
    """BlockSpec for a weight that is identical at every grid step.

    index_map is constant, so double-buffering buys nothing; request a single
    buffer when this JAX version exposes pipeline_mode / pl.Buffered.
    """
    index_map = lambda b, c: (0,) * len(shape)
    buffered = getattr(pl, "Buffered", None)
    if buffered is not None:
        try:
            return pl.BlockSpec(shape, index_map, pipeline_mode=buffered(1))
        except TypeError:
            pass
    return pl.BlockSpec(shape, index_map)


def _lstm_chunk_kernel(x_ref, len_ref, wx_ref, wh_ref, b_ref, out_ref,
                       gx_sc, h_sc, c_sc, *, tc, bt, hp, unroll):
    """One grid step == `tc` LSTM time steps for one batch tile.

    NOTE: the grid is (batch_tiles, time_chunks) and the TIME axis must stay
    the innermost ("arbitrary") axis — h_sc/c_sc carry recurrent state across
    time chunks and are reset when program_id(1) == 0.

    x_ref   : (Tc, Bt, Dp)     time-major input chunk (compute dtype)
    len_ref : (Bt, 1) int32    sequence lengths (resident across time)
    wx_ref  : (Dp, 4*Hp)       input-projection weight (resident, 1-buffered)
    wh_ref  : (Hp, 4*Hp)       recurrent weight (resident, 1-buffered)
    b_ref   : (1, 4*Hp) f32    fused bias (b_ih + b_hh; zero for this module)
    out_ref : (Bt, Hp)  f32    h_n accumulator (resident across time)
    gx_sc   : (Tc*Bt, 4*Hp) f32  hoisted input projection for the whole chunk
    h_sc/c_sc: (Bt, Hp) f32    recurrent state carried across time chunks
    """
    chunk = pl.program_id(1)

    @pl.when(chunk == 0)
    def _init():
        h_sc[...] = jnp.zeros_like(h_sc)
        c_sc[...] = jnp.zeros_like(c_sc)
        out_ref[...] = jnp.zeros_like(out_ref)

    # ---- Input projection hoisted out of the recurrence --------------------
    # ONE big MXU matmul per chunk; bias folded in via a broadcast VPU add.
    dp = x_ref.shape[-1]
    x2d = x_ref[...].reshape(tc * bt, dp)                       # layout no-op
    gx_sc[...] = (jnp.dot(x2d, wx_ref[...], preferred_element_type=jnp.float32)
                  + b_ref[...])

    lens = len_ref[...]          # (Bt, 1) int32, loaded once per chunk
    w_h = wh_ref[...]            # (Hp, 4*Hp) resident recurrent weight
    t0 = chunk * tc

    def step(i, carry):
        h, c, out = carry
        # Only the small serial-dependence matmul stays inside the loop.
        off = pl.multiple_of(i * bt, bt)
        gates = gx_sc[pl.ds(off, bt), :] + jnp.dot(
            h.astype(w_h.dtype), w_h, preferred_element_type=jnp.float32)
        # Whole-vreg (128-lane) gate slices; all elementwise math stays f32.
        i_g = _sigmoid_tanh(gates[:, 0 * hp:1 * hp])
        f_g = _sigmoid_tanh(gates[:, 1 * hp:2 * hp])
        g_g = jnp.tanh(gates[:, 2 * hp:3 * hp])
        o_g = _sigmoid_tanh(gates[:, 3 * hp:4 * hp])
        c = f_g * c + i_g * g_g
        h = o_g * jnp.tanh(c)
        # Record h at each row's last valid step (t == len-1) == packed h_n.
        rec = lens == (t0 + i + 1)                                  # (Bt, 1)
        out = jnp.where(rec, h, out)
        return h, c, out

    h, c, out = lax.fori_loop(
        0, tc, step, (h_sc[...], c_sc[...], out_ref[...]), unroll=unroll)

    h_sc[...] = h
    c_sc[...] = c
    out_ref[...] = out


def seq2seq_rnn_pallas(q_emb, q_len, w_ih, w_hh, b_ih=None, b_hh=None, *,
                       time_chunk=32, batch_block=None,
                       compute_dtype=jnp.bfloat16, recurrent_dtype=None,
                       unroll=8):
    """q_emb: (B, T, D) float32 (batch-first, like the PyTorch module).
    q_len: (B,) int32 with 1 <= q_len <= T.  w_ih: (4H, D), w_hh: (4H, H),
    optional biases (4H,).  Returns h_n of shape (B, H) float32.

    Tuning: v6e/v5e (128 MiB VMEM) like time_chunk 64-128 and batch_block up
    to 128-256; v7x (64 MiB VMEM) roughly half that.  compute_dtype=bf16 is
    the fast MXU path on all three generations; accumulation and gate math are
    always f32."""
    B, T, D = q_emb.shape
    H = w_hh.shape[1]
    assert w_ih.shape == (4 * H, D) and w_hh.shape == (4 * H, H)

    compute_dtype = jnp.dtype(compute_dtype)
    rec_dtype = (jnp.dtype(recurrent_dtype) if recurrent_dtype is not None
                 else compute_dtype)

    # vreg-aligned padded sizes.
    Hp = _round_up(H, 128)                       # lane-dense gates / output
    Dp = _round_up(D, 128)                       # no bias column — bias is a VPU add
    if batch_block is None:
        if B > 16:
            # >= 2 batch grid points so both v7x TensorCores get work, while
            # keeping the MXU M dimension reasonably large.
            batch_block = min(128, _round_up((B + 1) // 2, 16))
        else:
            batch_block = 16
    Bt = _round_up(min(batch_block, B), 16)
    Bp = _round_up(B, Bt)
    nb = Bp // Bt
    Tc = max(1, min(time_chunk, T))
    nc = pl.cdiv(T, Tc)
    Tp = nc * Tc

    # Time-major zero-padded input, built directly in compute_dtype
    # (no f32 staging copy).
    x = jnp.zeros((Tp, Bp, Dp), compute_dtype)
    x = x.at[:T, :B, :D].set(jnp.transpose(q_emb, (1, 0, 2)).astype(compute_dtype))

    q_len = jnp.asarray(q_len, jnp.int32)
    lens = jnp.zeros((Bp, 1), jnp.int32).at[:B, 0].set(q_len)

    # Split weights: w_x (Dp, 4*Hp) for the hoisted input projection,
    # w_h (Hp, 4*Hp) for the recurrent matmul; each gate padded to Hp columns.
    bias = jnp.zeros((4 * H,), jnp.float32)
    if b_ih is not None:
        bias = bias + b_ih.astype(jnp.float32)
    if b_hh is not None:
        bias = bias + b_hh.astype(jnp.float32)
    wih_t = jnp.transpose(w_ih).astype(jnp.float32)   # (D, 4H)
    whh_t = jnp.transpose(w_hh).astype(jnp.float32)   # (H, 4H)
    w_x = jnp.zeros((Dp, 4 * Hp), jnp.float32)
    w_h = jnp.zeros((Hp, 4 * Hp), jnp.float32)
    b = jnp.zeros((1, 4 * Hp), jnp.float32)
    for g in range(4):
        w_x = w_x.at[:D, g * Hp:g * Hp + H].set(wih_t[:, g * H:(g + 1) * H])
        w_h = w_h.at[:H, g * Hp:g * Hp + H].set(whh_t[:, g * H:(g + 1) * H])
        b = b.at[0, g * Hp:g * Hp + H].set(bias[g * H:(g + 1) * H])
    w_x = w_x.astype(compute_dtype)
    w_h = w_h.astype(rec_dtype)

    # Explicit VMEM budget (v7x has 64 MiB physical; v5e/v6e have 128 MiB).
    cbytes = compute_dtype.itemsize
    vmem_est = (2 * Tc * Bt * Dp * cbytes                 # x (double-buffered)
                + Dp * 4 * Hp * cbytes                    # w_x (1 buffer)
                + Hp * 4 * Hp * rec_dtype.itemsize        # w_h (1 buffer)
                + 4 * Hp * 4                              # bias
                + Tc * Bt * 4 * Hp * 4                    # gates_x scratch (f32)
                + 2 * Bt * Hp * 4                         # h / c scratch
                + 2 * Bt * Hp * 4)                        # out (double-buffered)
    vmem_limit = int(min(64 * 1024 * 1024, max(2 * vmem_est, 16 * 1024 * 1024)))

    kernel = functools.partial(_lstm_chunk_kernel, tc=Tc, bt=Bt, hp=Hp,
                               unroll=max(1, min(unroll, Tc)))

    out = pl.pallas_call(
        kernel,
        out_shape=jax.ShapeDtypeStruct((Bp, Hp), jnp.float32),
        grid_spec=pltpu.PrefetchScalarGridSpec(
            num_scalar_prefetch=0,
            grid=(nb, nc),                                    # (batch tiles, time chunks)
            in_specs=[
                pl.BlockSpec((Tc, Bt, Dp), lambda b, c: (c, b, 0)),   # x chunk
                pl.BlockSpec((Bt, 1), lambda b, c: (b, 0)),           # lengths
                _resident_spec((Dp, 4 * Hp)),                         # w_x
                _resident_spec((Hp, 4 * Hp)),                         # w_h
                _resident_spec((1, 4 * Hp)),                          # bias
            ],
            out_specs=pl.BlockSpec((Bt, Hp), lambda b, c: (b, 0)),    # resident accumulator
            scratch_shapes=[
                pltpu.VMEM((Tc * Bt, 4 * Hp), jnp.float32),   # hoisted gates_x
                pltpu.VMEM((Bt, Hp), jnp.float32),            # h state
                pltpu.VMEM((Bt, Hp), jnp.float32),            # c state
            ],
        ),
        compiler_params=pltpu.CompilerParams(
            # batch tiles independent (megacore); time axis is the recurrence
            # and MUST remain the innermost grid axis (scratch carry).
            dimension_semantics=("parallel", "arbitrary"),
            vmem_limit_bytes=vmem_limit,
        ),
    )(x, lens, w_x, w_h, b)

    return out[:B, :H]


def _xavier_lstm_weight(key, hidden, fan_in):
    """Mimics init.xavier_uniform on each of the 4 gate chunks of a (4H, fan_in) weight."""
    bound = math.sqrt(6.0 / (hidden + fan_in))
    chunks = []
    for _ in range(4):
        key, sub = jax.random.split(key)
        chunks.append(jax.random.uniform(sub, (hidden, fan_in), jnp.float32,
                                         minval=-bound, maxval=bound))
    return jnp.concatenate(chunks, axis=0), key


def _reference_forward(q_emb, q_len, w_ih, w_hh):
    """Pure-JAX reference of the PyTorch forward (packed LSTM -> h_n, original order)."""
    B, T, D = q_emb.shape
    H = w_hh.shape[1]

    def step(carry, x_t):
        h, c = carry
        gates = x_t @ w_ih.T + h @ w_hh.T
        i_g = jax.nn.sigmoid(gates[:, :H])
        f_g = jax.nn.sigmoid(gates[:, H:2 * H])
        g_g = jnp.tanh(gates[:, 2 * H:3 * H])
        o_g = jax.nn.sigmoid(gates[:, 3 * H:])
        c = f_g * c + i_g * g_g
        h = o_g * jnp.tanh(c)
        return (h, c), h

    init = (jnp.zeros((B, H), jnp.float32), jnp.zeros((B, H), jnp.float32))
    _, hs = jax.lax.scan(step, init, jnp.swapaxes(q_emb, 0, 1))   # hs: (T, B, H)
    return hs[q_len - 1, jnp.arange(B)]


if __name__ == "__main__":
    # Small shapes: batch=4, seq=8, input_features=16, rnn_features=32 (4H = 128)
    B, T, D, H = 4, 8, 16, 32

    key = jax.random.PRNGKey(0)
    key, k_x = jax.random.split(key)
    q_emb = jax.random.normal(k_x, (B, T, D), dtype=jnp.float32)
    q_len = jnp.array([8, 3, 5, 1], dtype=jnp.int32)    # variable lengths, max == T

    w_ih, key = _xavier_lstm_weight(key, H, D)          # (4H, D)
    w_hh, key = _xavier_lstm_weight(key, H, H)          # (4H, H)
    # Biases are zero per init_weight(); the kernel supports nonzero biases too.

    ref = _reference_forward(q_emb, q_len, w_ih, w_hh)

    # f32 operands everywhere — tight check.
    out_f32 = jax.block_until_ready(
        seq2seq_rnn_pallas(q_emb, q_len, w_ih, w_hh,
                           compute_dtype=jnp.float32))
    assert out_f32.shape == (B, H)
    assert jnp.allclose(out_f32, ref, atol=1e-4, rtol=1e-4), \
        "Pallas LSTM (f32) mismatch vs reference"

    # Default path: bf16 MXU operands with f32 accumulation — loose check.
    out_bf16 = jax.block_until_ready(
        seq2seq_rnn_pallas(q_emb, q_len, w_ih, w_hh))
    assert out_bf16.shape == (B, H)
    assert jnp.allclose(out_bf16, ref, atol=5e-2, rtol=5e-2), \
        "Pallas LSTM (bf16) mismatch vs reference"

    print("KERNEL_OK")
</pallas_src>

<mosaic_0001>
module attributes {stable_mosaic.version = 11 : i64} {
  func.func @_lstm_chunk_kernel(%arg0: i32, %arg1: i32, %arg2: memref<8x16x128xf32, #tpu.memory_space<vmem>>, %arg3: memref<16x1xi32, #tpu.memory_space<vmem>>, %arg4: memref<128x512xf32, #tpu.memory_space<vmem>>, %arg5: memref<128x512xf32, #tpu.memory_space<vmem>>, %arg6: memref<1x512xf32, #tpu.memory_space<vmem>>, %arg7: memref<16x128xf32, #tpu.memory_space<vmem>>, %arg8: memref<128x512xf32, #tpu.memory_space<vmem>>, %arg9: memref<16x128xf32, #tpu.memory_space<vmem>>, %arg10: memref<16x128xf32, #tpu.memory_space<vmem>>) attributes {dimension_semantics = [#tpu.dimension_semantics<parallel>, #tpu.dimension_semantics<arbitrary>], iteration_bounds = array<i64: 1, 1>, scalar_prefetch = 0 : i64, scratch_operands = 3 : i64, tpu.core_type = #tpu.core_type<tc>, window_params = [{transform_indices = @transform_0, window_bounds = array<i64: 8, 16, 128>}, {transform_indices = @transform_1, window_bounds = array<i64: 16, 1>}, {pipeline_mode = #tpu.pipeline_mode<synchronous>, transform_indices = @transform_2, window_bounds = array<i64: 128, 512>}, {pipeline_mode = #tpu.pipeline_mode<synchronous>, transform_indices = @transform_3, window_bounds = array<i64: 128, 512>}, {pipeline_mode = #tpu.pipeline_mode<synchronous>, transform_indices = @transform_4, window_bounds = array<i64: 1, 512>}, {transform_indices = @transform_5, window_bounds = array<i64: 16, 128>}]} {
    %c0_i32 = arith.constant 0 : i32
    %0 = arith.cmpi eq, %arg1, %c0_i32 : i32
    %1 = arith.extui %0 : i1 to i32
    %c0_i32_0 = arith.constant 0 : i32
    %2 = arith.cmpi ne, %1, %c0_i32_0 : i32
    scf.if %2 {
      %cst_130 = arith.constant 0.000000e+00 : f32
      %372 = vector.broadcast %cst_130 : f32 to vector<16x128xf32>
      %c0_131 = arith.constant 0 : index
      %c0_132 = arith.constant 0 : index
      %373 = vector.load %arg9[%c0_131, %c0_132] : memref<16x128xf32, #tpu.memory_space<vmem>>, vector<16x128xf32>
      tpu.vector_store %arg9[%c0_131, %c0_132], %372 {strides = array<i32>} : memref<16x128xf32, #tpu.memory_space<vmem>>, vector<16x128xf32>,
      %cst_133 = arith.constant 0.000000e+00 : f32
      %374 = vector.broadcast %cst_133 : f32 to vector<16x128xf32>
      %c0_134 = arith.constant 0 : index
      %c0_135 = arith.constant 0 : index
      %375 = vector.load %arg10[%c0_134, %c0_135] : memref<16x128xf32, #tpu.memory_space<vmem>>, vector<16x128xf32>
      tpu.vector_store %arg10[%c0_134, %c0_135], %374 {strides = array<i32>} : memref<16x128xf32, #tpu.memory_space<vmem>>, vector<16x128xf32>,
      %cst_136 = arith.constant 0.000000e+00 : f32
      %376 = vector.broadcast %cst_136 : f32 to vector<16x128xf32>
      %c0_137 = arith.constant 0 : index
      %c0_138 = arith.constant 0 : index
      %377 = vector.load %arg7[%c0_137, %c0_138] : memref<16x128xf32, #tpu.memory_space<vmem>>, vector<16x128xf32>
      tpu.vector_store %arg7[%c0_137, %c0_138], %376 {strides = array<i32>} : memref<16x128xf32, #tpu.memory_space<vmem>>, vector<16x128xf32>,
    } else {
    }
    %c0 = arith.constant 0 : index
    %c0_1 = arith.constant 0 : index
    %c0_2 = arith.constant 0 : index
    %3 = vector.load %arg2[%c0, %c0_1, %c0_2] : memref<8x16x128xf32, #tpu.memory_space<vmem>>, vector<8x16x128xf32>
    %4 = vector.shape_cast %3 : vector<8x16x128xf32> to vector<128x128xf32>
    %c0_3 = arith.constant 0 : index
    %c0_4 = arith.constant 0 : index
    %5 = vector.load %arg4[%c0_3, %c0_4] : memref<128x512xf32, #tpu.memory_space<vmem>>, vector<128x512xf32>
    %cst = arith.constant dense<0.000000e+00> : vector<128x512xf32>
    %6 = tpu.matmul %4, %5, %cst {dimension_numbers = #tpu.dot_dimension_numbers<[1], [0], [0], [1], [0, 0, 1, 1], [], []>} : vector<128x128xf32>, vector<128x512xf32>, vector<128x512xf32> -> vector<128x512xf32>
    %c0_5 = arith.constant 0 : index
    %c0_6 = arith.constant 0 : index
    %7 = vector.load %arg6[%c0_5, %c0_6] : memref<1x512xf32, #tpu.memory_space<vmem>>, vector<1x512xf32>
    %8 = vector.broadcast %7 : vector<1x512xf32> to vector<128x512xf32>
    %9 = arith.addf %6, %8 : vector<128x512xf32>
    %c0_7 = arith.constant 0 : index
    %c0_8 = arith.constant 0 : index
    %10 = vector.load %arg8[%c0_7, %c0_8] : memref<128x512xf32, #tpu.memory_space<vmem>>, vector<128x512xf32>
    tpu.vector_store %arg8[%c0_7, %c0_8], %9 {strides = array<i32>} : memref<128x512xf32, #tpu.memory_space<vmem>>, vector<128x512xf32>,
    %c0_9 = arith.constant 0 : index
    %c0_10 = arith.constant 0 : index
    %11 = vector.load %arg3[%c0_9, %c0_10] : memref<16x1xi32, #tpu.memory_space<vmem>>, vector<16x1xi32>
    %c0_11 = arith.constant 0 : index
    %c0_12 = arith.constant 0 : index
    %12 = vector.load %arg5[%c0_11, %c0_12] : memref<128x512xf32, #tpu.memory_space<vmem>>, vector<128x512xf32>
    %c8_i32 = arith.constant 8 : i32
    %13 = arith.muli %arg1, %c8_i32 : i32
    %c0_13 = arith.constant 0 : index
    %c0_14 = arith.constant 0 : index
    %14 = vector.load %arg9[%c0_13, %c0_14] : memref<16x128xf32, #tpu.memory_space<vmem>>, vector<16x128xf32>
    %c0_15 = arith.constant 0 : index
    %c0_16 = arith.constant 0 : index
    %15 = vector.load %arg10[%c0_15, %c0_16] : memref<16x128xf32, #tpu.memory_space<vmem>>, vector<16x128xf32>
    %c0_17 = arith.constant 0 : index
    %c0_18 = arith.constant 0 : index
    %16 = vector.load %arg7[%c0_17, %c0_18] : memref<16x128xf32, #tpu.memory_space<vmem>>, vector<16x128xf32>
    %c0_i32_19 = arith.constant 0 : i32
    %c16_i32 = arith.constant 16 : i32
    %17 = arith.muli %c0_i32_19, %c16_i32 : i32
    %18 = tpu.assume_multiple %17, 16 : i32
    %19 = arith.index_cast %18 : i32 to index
    %c0_20 = arith.constant 0 : index
    %20 = vector.load %arg8[%19, %c0_20] : memref<128x512xf32, #tpu.memory_space<vmem>>, vector<16x512xf32>
    %cst_21 = arith.constant dense<0.000000e+00> : vector<16x512xf32>
    %21 = tpu.matmul %14, %12, %cst_21 {dimension_numbers = #tpu.dot_dimension_numbers<[1], [0], [0], [1], [0, 0, 1, 1], [], []>} : vector<16x128xf32>, vector<128x512xf32>, vector<16x512xf32> -> vector<16x512xf32>
    %22 = arith.addf %20, %21 : vector<16x512xf32>
    %23 = vector.extract_strided_slice %22 {offsets = [0, 0], sizes = [16, 128], strides = [1, 1]} : vector<16x512xf32> to vector<16x128xf32>
    %cst_22 = arith.constant 5.000000e-01 : f32
    %24 = vector.broadcast %cst_22 : f32 to vector<16x128xf32>
    %25 = arith.mulf %24, %23 : vector<16x128xf32>
    %26 = math.tanh %25 : vector<16x128xf32>
    %cst_23 = arith.constant 1.000000e+00 : f32
    %27 = vector.broadcast %cst_23 : f32 to vector<16x128xf32>
    %28 = arith.addf %26, %27 : vector<16x128xf32>
    %cst_24 = arith.constant 5.000000e-01 : f32
    %29 = vector.broadcast %cst_24 : f32 to vector<16x128xf32>
    %30 = arith.mulf %29, %28 : vector<16x128xf32>
    %31 = vector.extract_strided_slice %22 {offsets = [0, 128], sizes = [16, 128], strides = [1, 1]} : vector<16x512xf32> to vector<16x128xf32>
    %cst_25 = arith.constant 5.000000e-01 : f32
    %32 = vector.broadcast %cst_25 : f32 to vector<16x128xf32>
    %33 = arith.mulf %32, %31 : vector<16x128xf32>
    %34 = math.tanh %33 : vector<16x128xf32>
    %cst_26 = arith.constant 1.000000e+00 : f32
    %35 = vector.broadcast %cst_26 : f32 to vector<16x128xf32>
    %36 = arith.addf %34, %35 : vector<16x128xf32>
    %cst_27 = arith.constant 5.000000e-01 : f32
    %37 = vector.broadcast %cst_27 : f32 to vector<16x128xf32>
    %38 = arith.mulf %37, %36 : vector<16x128xf32>
    %39 = vector.extract_strided_slice %22 {offsets = [0, 256], sizes = [16, 128], strides = [1, 1]} : vector<16x512xf32> to vector<16x128xf32>
    %40 = math.tanh %39 : vector<16x128xf32>
    %41 = vector.extract_strided_slice %22 {offsets = [0, 384], sizes = [16, 128], strides = [1, 1]} : vector<16x512xf32> to vector<16x128xf32>
    %cst_28 = arith.constant 5.000000e-01 : f32
    %42 = vector.broadcast %cst_28 : f32 to vector<16x128xf32>
    %43 = arith.mulf %42, %41 : vector<16x128xf32>
    %44 = math.tanh %43 : vector<16x128xf32>
    %cst_29 = arith.constant 1.000000e+00 : f32
    %45 = vector.broadcast %cst_29 : f32 to vector<16x128xf32>
    %46 = arith.addf %44, %45 : vector<16x128xf32>
    %cst_30 = arith.constant 5.000000e-01 : f32
    %47 = vector.broadcast %cst_30 : f32 to vector<16x128xf32>
    %48 = arith.mulf %47, %46 : vector<16x128xf32>
    %49 = arith.mulf %38, %15 : vector<16x128xf32>
    %50 = arith.mulf %30, %40 : vector<16x128xf32>
    %51 = arith.addf %49, %50 : vector<16x128xf32>
    %52 = math.tanh %51 : vector<16x128xf32>
    %53 = arith.mulf %48, %52 : vector<16x128xf32>
    %54 = arith.addi %13, %c0_i32_19 : i32
    %c1_i32 = arith.constant 1 : i32
    %55 = arith.addi %54, %c1_i32 : i32
    %56 = vector.broadcast %55 : i32 to vector<16x1xi32>
    %57 = arith.cmpi eq, %11, %56 : vector<16x1xi32>
    %58 = vector.shape_cast %57 : vector<16x1xi1> to vector<16x1xi1>
    %59 = vector.broadcast %58 : vector<16x1xi1> to vector<16x128xi1>
    %60 = arith.select %59, %53, %16 : vector<16x128xi1>, vector<16x128xf32>
    %c1_i32_31 = arith.constant 1 : i32
    %c16_i32_32 = arith.constant 16 : i32
    %61 = arith.muli %c1_i32_31, %c16_i32_32 : i32
    %62 = tpu.assume_multiple %61, 16 : i32
    %63 = arith.index_cast %62 : i32 to index
    %c0_33 = arith.constant 0 : index
    %64 = vector.load %arg8[%63, %c0_33] : memref<128x512xf32, #tpu.memory_space<vmem>>, vector<16x512xf32>
    %cst_34 = arith.constant dense<0.000000e+00> : vector<16x512xf32>
    %65 = tpu.matmul %53, %12, %cst_34 {dimension_numbers = #tpu.dot_dimension_numbers<[1], [0], [0], [1], [0, 0, 1, 1], [], []>} : vector<16x128xf32>, vector<128x512xf32>, vector<16x512xf32> -> vector<16x512xf32>
    %66 = arith.addf %64, %65 : vector<16x512xf32>
    %67 = vector.extract_strided_slice %66 {offsets = [0, 0], sizes = [16, 128], strides = [1, 1]} : vector<16x512xf32> to vector<16x128xf32>
    %cst_35 = arith.constant 5.000000e-01 : f32
    %68 = vector.broadcast %cst_35 : f32 to vector<16x128xf32>
    %69 = arith.mulf %68, %67 : vector<16x128xf32>
    %70 = math.tanh %69 : vector<16x128xf32>
    %cst_36 = arith.constant 1.000000e+00 : f32
    %71 = vector.broadcast %cst_36 : f32 to vector<16x128xf32>
    %72 = arith.addf %70, %71 : vector<16x128xf32>
    %cst_37 = arith.constant 5.000000e-01 : f32
    %73 = vector.broadcast %cst_37 : f32 to vector<16x128xf32>
    %74 = arith.mulf %73, %72 : vector<16x128xf32>
    %75 = vector.extract_strided_slice %66 {offsets = [0, 128], sizes = [16, 128], strides = [1, 1]} : vector<16x512xf32> to vector<16x128xf32>
    %cst_38 = arith.constant 5.000000e-01 : f32
    %76 = vector.broadcast %cst_38 : f32 to vector<16x128xf32>
    %77 = arith.mulf %76, %75 : vector<16x128xf32>
    %78 = math.tanh %77 : vector<16x128xf32>
    %cst_39 = arith.constant 1.000000e+00 : f32
    %79 = vector.broadcast %cst_39 : f32 to vector<16x128xf32>
    %80 = arith.addf %78, %79 : vector<16x128xf32>
    %cst_40 = arith.constant 5.000000e-01 : f32
    %81 = vector.broadcast %cst_40 : f32 to vector<16x128xf32>
    %82 = arith.mulf %81, %80 : vector<16x128xf32>
    %83 = vector.extract_strided_slice %66 {offsets = [0, 256], sizes = [16, 128], strides = [1, 1]} : vector<16x512xf32> to vector<16x128xf32>
    %84 = math.tanh %83 : vector<16x128xf32>
    %85 = vector.extract_strided_slice %66 {offsets = [0, 384], sizes = [16, 128], strides = [1, 1]} : vector<16x512xf32> to vector<16x128xf32>
    %cst_41 = arith.constant 5.000000e-01 : f32
    %86 = vector.broadcast %cst_41 : f32 to vector<16x128xf32>
    %87 = arith.mulf %86, %85 : vector<16x128xf32>
    %88 = math.tanh %87 : vector<16x128xf32>
    %cst_42 = arith.constant 1.000000e+00 : f32
    %89 = vector.broadcast %cst_42 : f32 to vector<16x128xf32>
    %90 = arith.addf %88, %89 : vector<16x128xf32>
    %cst_43 = arith.constant 5.000000e-01 : f32
    %91 = vector.broadcast %cst_43 : f32 to vector<16x128xf32>
    %92 = arith.mulf %91, %90 : vector<16x128xf32>
    %93 = arith.mulf %82, %51 : vector<16x128xf32>
    %94 = arith.mulf %74, %84 : vector<16x128xf32>
    %95 = arith.addf %93, %94 : vector<16x128xf32>
    %96 = math.tanh %95 : vector<16x128xf32>
    %97 = arith.mulf %92, %96 : vector<16x128xf32>
    %98 = arith.addi %13, %c1_i32_31 : i32
    %c1_i32_44 = arith.constant 1 : i32
    %99 = arith.addi %98, %c1_i32_44 : i32
    %100 = vector.broadcast %99 : i32 to vector<16x1xi32>
    %101 = arith.cmpi eq, %11, %100 : vector<16x1xi32>
    %102 = vector.shape_cast %101 : vector<16x1xi1> to vector<16x1xi1>
    %103 = vector.broadcast %102 : vector<16x1xi1> to vector<16x128xi1>
    %104 = arith.select %103, %97, %60 : vector<16x128xi1>, vector<16x128xf32>
    %c2_i32 = arith.constant 2 : i32
    %c16_i32_45 = arith.constant 16 : i32
    %105 = arith.muli %c2_i32, %c16_i32_45 : i32
    %106 = tpu.assume_multiple %105, 16 : i32
    %107 = arith.index_cast %106 : i32 to index
    %c0_46 = arith.constant 0 : index
    %108 = vector.load %arg8[%107, %c0_46] : memref<128x512xf32, #tpu.memory_space<vmem>>, vector<16x512xf32>
    %cst_47 = arith.constant dense<0.000000e+00> : vector<16x512xf32>
    %109 = tpu.matmul %97, %12, %cst_47 {dimension_numbers = #tpu.dot_dimension_numbers<[1], [0], [0], [1], [0, 0, 1, 1], [], []>} : vector<16x128xf32>, vector<128x512xf32>, vector<16x512xf32> -> vector<16x512xf32>
    %110 = arith.addf %108, %109 : vector<16x512xf32>
    %111 = vector.extract_strided_slice %110 {offsets = [0, 0], sizes = [16, 128], strides = [1, 1]} : vector<16x512xf32> to vector<16x128xf32>
    %cst_48 = arith.constant 5.000000e-01 : f32
    %112 = vector.broadcast %cst_48 : f32 to vector<16x128xf32>
    %113 = arith.mulf %112, %111 : vector<16x128xf32>
    %114 = math.tanh %113 : vector<16x128xf32>
    %cst_49 = arith.constant 1.000000e+00 : f32
    %115 = vector.broadcast %cst_49 : f32 to vector<16x128xf32>
    %116 = arith.addf %114, %115 : vector<16x128xf32>
    %cst_50 = arith.constant 5.000000e-01 : f32
    %117 = vector.broadcast %cst_50 : f32 to vector<16x128xf32>
    %118 = arith.mulf %117, %116 : vector<16x128xf32>
    %119 = vector.extract_strided_slice %110 {offsets = [0, 128], sizes = [16, 128], strides = [1, 1]} : vector<16x512xf32> to vector<16x128xf32>
    %cst_51 = arith.constant 5.000000e-01 : f32
    %120 = vector.broadcast %cst_51 : f32 to vector<16x128xf32>
    %121 = arith.mulf %120, %119 : vector<16x128xf32>
    %122 = math.tanh %121 : vector<16x128xf32>
    %cst_52 = arith.constant 1.000000e+00 : f32
    %123 = vector.broadcast %cst_52 : f32 to vector<16x128xf32>
    %124 = arith.addf %122, %123 : vector<16x128xf32>
    %cst_53 = arith.constant 5.000000e-01 : f32
    %125 = vector.broadcast %cst_53 : f32 to vector<16x128xf32>
    %126 = arith.mulf %125, %124 : vector<16x128xf32>
    %127 = vector.extract_strided_slice %110 {offsets = [0, 256], sizes = [16, 128], strides = [1, 1]} : vector<16x512xf32> to vector<16x128xf32>
    %128 = math.tanh %127 : vector<16x128xf32>
    %129 = vector.extract_strided_slice %110 {offsets = [0, 384], sizes = [16, 128], strides = [1, 1]} : vector<16x512xf32> to vector<16x128xf32>
    %cst_54 = arith.constant 5.000000e-01 : f32
    %130 = vector.broadcast %cst_54 : f32 to vector<16x128xf32>
    %131 = arith.mulf %130, %129 : vector<16x128xf32>
    %132 = math.tanh %131 : vector<16x128xf32>
    %cst_55 = arith.constant 1.000000e+00 : f32
    %133 = vector.broadcast %cst_55 : f32 to vector<16x128xf32>
    %134 = arith.addf %132, %133 : vector<16x128xf32>
    %cst_56 = arith.constant 5.000000e-01 : f32
    %135 = vector.broadcast %cst_56 : f32 to vector<16x128xf32>
    %136 = arith.mulf %135, %134 : vector<16x128xf32>
    %137 = arith.mulf %126, %95 : vector<16x128xf32>
    %138 = arith.mulf %118, %128 : vector<16x128xf32>
    %139 = arith.addf %137, %138 : vector<16x128xf32>
    %140 = math.tanh %139 : vector<16x128xf32>
    %141 = arith.mulf %136, %140 : vector<16x128xf32>
    %142 = arith.addi %13, %c2_i32 : i32
    %c1_i32_57 = arith.constant 1 : i32
    %143 = arith.addi %142, %c1_i32_57 : i32
    %144 = vector.broadcast %143 : i32 to vector<16x1xi32>
    %145 = arith.cmpi eq, %11, %144 : vector<16x1xi32>
    %146 = vector.shape_cast %145 : vector<16x1xi1> to vector<16x1xi1>
    %147 = vector.broadcast %146 : vector<16x1xi1> to vector<16x128xi1>
    %148 = arith.select %147, %141, %104 : vector<16x128xi1>, vector<16x128xf32>
    %c3_i32 = arith.constant 3 : i32
    %c16_i32_58 = arith.constant 16 : i32
    %149 = arith.muli %c3_i32, %c16_i32_58 : i32
    %150 = tpu.assume_multiple %149, 16 : i32
    %151 = arith.index_cast %150 : i32 to index
    %c0_59 = arith.constant 0 : index
    %152 = vector.load %arg8[%151, %c0_59] : memref<128x512xf32, #tpu.memory_space<vmem>>, vector<16x512xf32>
    %cst_60 = arith.constant dense<0.000000e+00> : vector<16x512xf32>
    %153 = tpu.matmul %141, %12, %cst_60 {dimension_numbers = #tpu.dot_dimension_numbers<[1], [0], [0], [1], [0, 0, 1, 1], [], []>} : vector<16x128xf32>, vector<128x512xf32>, vector<16x512xf32> -> vector<16x512xf32>
    %154 = arith.addf %152, %153 : vector<16x512xf32>
    %155 = vector.extract_strided_slice %154 {offsets = [0, 0], sizes = [16, 128], strides = [1, 1]} : vector<16x512xf32> to vector<16x128xf32>
    %cst_61 = arith.constant 5.000000e-01 : f32
    %156 = vector.broadcast %cst_61 : f32 to vector<16x128xf32>
    %157 = arith.mulf %156, %155 : vector<16x128xf32>
    %158 = math.tanh %157 : vector<16x128xf32>
    %cst_62 = arith.constant 1.000000e+00 : f32
    %159 = vector.broadcast %cst_62 : f32 to vector<16x128xf32>
    %160 = arith.addf %158, %159 : vector<16x128xf32>
    %cst_63 = arith.constant 5.000000e-01 : f32
    %161 = vector.broadcast %cst_63 : f32 to vector<16x128xf32>
    %162 = arith.mulf %161, %160 : vector<16x128xf32>
    %163 = vector.extract_strided_slice %154 {offsets = [0, 128], sizes = [16, 128], strides = [1, 1]} : vector<16x512xf32> to vector<16x128xf32>
    %cst_64 = arith.constant 5.000000e-01 : f32
    %164 = vector.broadcast %cst_64 : f32 to vector<16x128xf32>
    %165 = arith.mulf %164, %163 : vector<16x128xf32>
    %166 = math.tanh %165 : vector<16x128xf32>
    %cst_65 = arith.constant 1.000000e+00 : f32
    %167 = vector.broadcast %cst_65 : f32 to vector<16x128xf32>
    %168 = arith.addf %166, %167 : vector<16x128xf32>
    %cst_66 = arith.constant 5.000000e-01 : f32
    %169 = vector.broadcast %cst_66 : f32 to vector<16x128xf32>
    %170 = arith.mulf %169, %168 : vector<16x128xf32>
    %171 = vector.extract_strided_slice %154 {offsets = [0, 256], sizes = [16, 128], strides = [1, 1]} : vector<16x512xf32> to vector<16x128xf32>
    %172 = math.tanh %171 : vector<16x128xf32>
    %173 = vector.extract_strided_slice %154 {offsets = [0, 384], sizes = [16, 128], strides = [1, 1]} : vector<16x512xf32> to vector<16x128xf32>
    %cst_67 = arith.constant 5.000000e-01 : f32
    %174 = vector.broadcast %cst_67 : f32 to vector<16x128xf32>
    %175 = arith.mulf %174, %173 : vector<16x128xf32>
    %176 = math.tanh %175 : vector<16x128xf32>
    %cst_68 = arith.constant 1.000000e+00 : f32
    %177 = vector.broadcast %cst_68 : f32 to vector<16x128xf32>
    %178 = arith.addf %176, %177 : vector<16x128xf32>
    %cst_69 = arith.constant 5.000000e-01 : f32
    %179 = vector.broadcast %cst_69 : f32 to vector<16x128xf32>
    %180 = arith.mulf %179, %178 : vector<16x128xf32>
    %181 = arith.mulf %170, %139 : vector<16x128xf32>
    %182 = arith.mulf %162, %172 : vector<16x128xf32>
    %183 = arith.addf %181, %182 : vector<16x128xf32>
    %184 = math.tanh %183 : vector<16x128xf32>
    %185 = arith.mulf %180, %184 : vector<16x128xf32>
    %186 = arith.addi %13, %c3_i32 : i32
    %c1_i32_70 = arith.constant 1 : i32
    %187 = arith.addi %186, %c1_i32_70 : i32
    %188 = vector.broadcast %187 : i32 to vector<16x1xi32>
    %189 = arith.cmpi eq, %11, %188 : vector<16x1xi32>
    %190 = vector.shape_cast %189 : vector<16x1xi1> to vector<16x1xi1>
    %191 = vector.broadcast %190 : vector<16x1xi1> to vector<16x128xi1>
    %192 = arith.select %191, %185, %148 : vector<16x128xi1>, vector<16x128xf32>
    %c4_i32 = arith.constant 4 : i32
    %c16_i32_71 = arith.constant 16 : i32
    %193 = arith.muli %c4_i32, %c16_i32_71 : i32
    %194 = tpu.assume_multiple %193, 16 : i32
    %195 = arith.index_cast %194 : i32 to index
    %c0_72 = arith.constant 0 : index
    %196 = vector.load %arg8[%195, %c0_72] : memref<128x512xf32, #tpu.memory_space<vmem>>, vector<16x512xf32>
    %cst_73 = arith.constant dense<0.000000e+00> : vector<16x512xf32>
    %197 = tpu.matmul %185, %12, %cst_73 {dimension_numbers = #tpu.dot_dimension_numbers<[1], [0], [0], [1], [0, 0, 1, 1], [], []>} : vector<16x128xf32>, vector<128x512xf32>, vector<16x512xf32> -> vector<16x512xf32>
    %198 = arith.addf %196, %197 : vector<16x512xf32>
    %199 = vector.extract_strided_slice %198 {offsets = [0, 0], sizes = [16, 128], strides = [1, 1]} : vector<16x512xf32> to vector<16x128xf32>
    %cst_74 = arith.constant 5.000000e-01 : f32
    %200 = vector.broadcast %cst_74 : f32 to vector<16x128xf32>
    %201 = arith.mulf %200, %199 : vector<16x128xf32>
    %202 = math.tanh %201 : vector<16x128xf32>
    %cst_75 = arith.constant 1.000000e+00 : f32
    %203 = vector.broadcast %cst_75 : f32 to vector<16x128xf32>
    %204 = arith.addf %202, %203 : vector<16x128xf32>
    %cst_76 = arith.constant 5.000000e-01 : f32
    %205 = vector.broadcast %cst_76 : f32 to vector<16x128xf32>
    %206 = arith.mulf %205, %204 : vector<16x128xf32>
    %207 = vector.extract_strided_slice %198 {offsets = [0, 128], sizes = [16, 128], strides = [1, 1]} : vector<16x512xf32> to vector<16x128xf32>
    %cst_77 = arith.constant 5.000000e-01 : f32
    %208 = vector.broadcast %cst_77 : f32 to vector<16x128xf32>
    %209 = arith.mulf %208, %207 : vector<16x128xf32>
    %210 = math.tanh %209 : vector<16x128xf32>
    %cst_78 = arith.constant 1.000000e+00 : f32
    %211 = vector.broadcast %cst_78 : f32 to vector<16x128xf32>
    %212 = arith.addf %210, %211 : vector<16x128xf32>
    %cst_79 = arith.constant 5.000000e-01 : f32
    %213 = vector.broadcast %cst_79 : f32 to vector<16x128xf32>
    %214 = arith.mulf %213, %212 : vector<16x128xf32>
    %215 = vector.extract_strided_slice %198 {offsets = [0, 256], sizes = [16, 128], strides = [1, 1]} : vector<16x512xf32> to vector<16x128xf32>
    %216 = math.tanh %215 : vector<16x128xf32>
    %217 = vector.extract_strided_slice %198 {offsets = [0, 384], sizes = [16, 128], strides = [1, 1]} : vector<16x512xf32> to vector<16x128xf32>
    %cst_80 = arith.constant 5.000000e-01 : f32
    %218 = vector.broadcast %cst_80 : f32 to vector<16x128xf32>
    %219 = arith.mulf %218, %217 : vector<16x128xf32>
    %220 = math.tanh %219 : vector<16x128xf32>
    %cst_81 = arith.constant 1.000000e+00 : f32
    %221 = vector.broadcast %cst_81 : f32 to vector<16x128xf32>
    %222 = arith.addf %220, %221 : vector<16x128xf32>
    %cst_82 = arith.constant 5.000000e-01 : f32
    %223 = vector.broadcast %cst_82 : f32 to vector<16x128xf32>
    %224 = arith.mulf %223, %222 : vector<16x128xf32>
    %225 = arith.mulf %214, %183 : vector<16x128xf32>
    %226 = arith.mulf %206, %216 : vector<16x128xf32>
    %227 = arith.addf %225, %226 : vector<16x128xf32>
    %228 = math.tanh %227 : vector<16x128xf32>
    %229 = arith.mulf %224, %228 : vector<16x128xf32>
    %230 = arith.addi %13, %c4_i32 : i32
    %c1_i32_83 = arith.constant 1 : i32
    %231 = arith.addi %230, %c1_i32_83 : i32
    %232 = vector.broadcast %231 : i32 to vector<16x1xi32>
    %233 = arith.cmpi eq, %11, %232 : vector<16x1xi32>
    %234 = vector.shape_cast %233 : vector<16x1xi1> to vector<16x1xi1>
    %235 = vector.broadcast %234 : vector<16x1xi1> to vector<16x128xi1>
    %236 = arith.select %235, %229, %192 : vector<16x128xi1>, vector<16x128xf32>
    %c5_i32 = arith.constant 5 : i32
    %c16_i32_84 = arith.constant 16 : i32
    %237 = arith.muli %c5_i32, %c16_i32_84 : i32
    %238 = tpu.assume_multiple %237, 16 : i32
    %239 = arith.index_cast %238 : i32 to index
    %c0_85 = arith.constant 0 : index
    %240 = vector.load %arg8[%239, %c0_85] : memref<128x512xf32, #tpu.memory_space<vmem>>, vector<16x512xf32>
    %cst_86 = arith.constant dense<0.000000e+00> : vector<16x512xf32>
    %241 = tpu.matmul %229, %12, %cst_86 {dimension_numbers = #tpu.dot_dimension_numbers<[1], [0], [0], [1], [0, 0, 1, 1], [], []>} : vector<16x128xf32>, vector<128x512xf32>, vector<16x512xf32> -> vector<16x512xf32>
    %242 = arith.addf %240, %241 : vector<16x512xf32>
    %243 = vector.extract_strided_slice %242 {offsets = [0, 0], sizes = [16, 128], strides = [1, 1]} : vector<16x512xf32> to vector<16x128xf32>
    %cst_87 = arith.constant 5.000000e-01 : f32
    %244 = vector.broadcast %cst_87 : f32 to vector<16x128xf32>
    %245 = arith.mulf %244, %243 : vector<16x128xf32>
    %246 = math.tanh %245 : vector<16x128xf32>
    %cst_88 = arith.constant 1.000000e+00 : f32
    %247 = vector.broadcast %cst_88 : f32 to vector<16x128xf32>
    %248 = arith.addf %246, %247 : vector<16x128xf32>
    %cst_89 = arith.constant 5.000000e-01 : f32
    %249 = vector.broadcast %cst_89 : f32 to vector<16x128xf32>
    %250 = arith.mulf %249, %248 : vector<16x128xf32>
    %251 = vector.extract_strided_slice %242 {offsets = [0, 128], sizes = [16, 128], strides = [1, 1]} : vector<16x512xf32> to vector<16x128xf32>
    %cst_90 = arith.constant 5.000000e-01 : f32
    %252 = vector.broadcast %cst_90 : f32 to vector<16x128xf32>
    %253 = arith.mulf %252, %251 : vector<16x128xf32>
    %254 = math.tanh %253 : vector<16x128xf32>
    %cst_91 = arith.constant 1.000000e+00 : f32
    %255 = vector.broadcast %cst_91 : f32 to vector<16x128xf32>
    %256 = arith.addf %254, %255 : vector<16x128xf32>
    %cst_92 = arith.constant 5.000000e-01 : f32
    %257 = vector.broadcast %cst_92 : f32 to vector<16x128xf32>
    %258 = arith.mulf %257, %256 : vector<16x128xf32>
    %259 = vector.extract_strided_slice %242 {offsets = [0, 256], sizes = [16, 128], strides = [1, 1]} : vector<16x512xf32> to vector<16x128xf32>
    %260 = math.tanh %259 : vector<16x128xf32>
    %261 = vector.extract_strided_slice %242 {offsets = [0, 384], sizes = [16, 128], strides = [1, 1]} : vector<16x512xf32> to vector<16x128xf32>
    %cst_93 = arith.constant 5.000000e-01 : f32
    %262 = vector.broadcast %cst_93 : f32 to vector<16x128xf32>
    %263 = arith.mulf %262, %261 : vector<16x128xf32>
    %264 = math.tanh %263 : vector<16x128xf32>
    %cst_94 = arith.constant 1.000000e+00 : f32
    %265 = vector.broadcast %cst_94 : f32 to vector<16x128xf32>
    %266 = arith.addf %264, %265 : vector<16x128xf32>
    %cst_95 = arith.constant 5.000000e-01 : f32
    %267 = vector.broadcast %cst_95 : f32 to vector<16x128xf32>
    %268 = arith.mulf %267, %266 : vector<16x128xf32>
    %269 = arith.mulf %258, %227 : vector<16x128xf32>
    %270 = arith.mulf %250, %260 : vector<16x128xf32>
    %271 = arith.addf %269, %270 : vector<16x128xf32>
    %272 = math.tanh %271 : vector<16x128xf32>
    %273 = arith.mulf %268, %272 : vector<16x128xf32>
    %274 = arith.addi %13, %c5_i32 : i32
    %c1_i32_96 = arith.constant 1 : i32
    %275 = arith.addi %274, %c1_i32_96 : i32
    %276 = vector.broadcast %275 : i32 to vector<16x1xi32>
    %277 = arith.cmpi eq, %11, %276 : vector<16x1xi32>
    %278 = vector.shape_cast %277 : vector<16x1xi1> to vector<16x1xi1>
    %279 = vector.broadcast %278 : vector<16x1xi1> to vector<16x128xi1>
    %280 = arith.select %279, %273, %236 : vector<16x128xi1>, vector<16x128xf32>
    %c6_i32 = arith.constant 6 : i32
    %c16_i32_97 = arith.constant 16 : i32
    %281 = arith.muli %c6_i32, %c16_i32_97 : i32
    %282 = tpu.assume_multiple %281, 16 : i32
    %283 = arith.index_cast %282 : i32 to index
    %c0_98 = arith.constant 0 : index
    %284 = vector.load %arg8[%283, %c0_98] : memref<128x512xf32, #tpu.memory_space<vmem>>, vector<16x512xf32>
    %cst_99 = arith.constant dense<0.000000e+00> : vector<16x512xf32>
    %285 = tpu.matmul %273, %12, %cst_99 {dimension_numbers = #tpu.dot_dimension_numbers<[1], [0], [0], [1], [0, 0, 1, 1], [], []>} : vector<16x128xf32>, vector<128x512xf32>, vector<16x512xf32> -> vector<16x512xf32>
    %286 = arith.addf %284, %285 : vector<16x512xf32>
    %287 = vector.extract_strided_slice %286 {offsets = [0, 0], sizes = [16, 128], strides = [1, 1]} : vector<16x512xf32> to vector<16x128xf32>
    %cst_100 = arith.constant 5.000000e-01 : f32
    %288 = vector.broadcast %cst_100 : f32 to vector<16x128xf32>
    %289 = arith.mulf %288, %287 : vector<16x128xf32>
    %290 = math.tanh %289 : vector<16x128xf32>
    %cst_101 = arith.constant 1.000000e+00 : f32
    %291 = vector.broadcast %cst_101 : f32 to vector<16x128xf32>
    %292 = arith.addf %290, %291 : vector<16x128xf32>
    %cst_102 = arith.constant 5.000000e-01 : f32
    %293 = vector.broadcast %cst_102 : f32 to vector<16x128xf32>
    %294 = arith.mulf %293, %292 : vector<16x128xf32>
    %295 = vector.extract_strided_slice %286 {offsets = [0, 128], sizes = [16, 128], strides = [1, 1]} : vector<16x512xf32> to vector<16x128xf32>
    %cst_103 = arith.constant 5.000000e-01 : f32
    %296 = vector.broadcast %cst_103 : f32 to vector<16x128xf32>
    %297 = arith.mulf %296, %295 : vector<16x128xf32>
    %298 = math.tanh %297 : vector<16x128xf32>
    %cst_104 = arith.constant 1.000000e+00 : f32
    %299 = vector.broadcast %cst_104 : f32 to vector<16x128xf32>
    %300 = arith.addf %298, %299 : vector<16x128xf32>
    %cst_105 = arith.constant 5.000000e-01 : f32
    %301 = vector.broadcast %cst_105 : f32 to vector<16x128xf32>
    %302 = arith.mulf %301, %300 : vector<16x128xf32>
    %303 = vector.extract_strided_slice %286 {offsets = [0, 256], sizes = [16, 128], strides = [1, 1]} : vector<16x512xf32> to vector<16x128xf32>
    %304 = math.tanh %303 : vector<16x128xf32>
    %305 = vector.extract_strided_slice %286 {offsets = [0, 384], sizes = [16, 128], strides = [1, 1]} : vector<16x512xf32> to vector<16x128xf32>
    %cst_106 = arith.constant 5.000000e-01 : f32
    %306 = vector.broadcast %cst_106 : f32 to vector<16x128xf32>
    %307 = arith.mulf %306, %305 : vector<16x128xf32>
    %308 = math.tanh %307 : vector<16x128xf32>
    %cst_107 = arith.constant 1.000000e+00 : f32
    %309 = vector.broadcast %cst_107 : f32 to vector<16x128xf32>
    %310 = arith.addf %308, %309 : vector<16x128xf32>
    %cst_108 = arith.constant 5.000000e-01 : f32
    %311 = vector.broadcast %cst_108 : f32 to vector<16x128xf32>
    %312 = arith.mulf %311, %310 : vector<16x128xf32>
    %313 = arith.mulf %302, %271 : vector<16x128xf32>
    %314 = arith.mulf %294, %304 : vector<16x128xf32>
    %315 = arith.addf %313, %314 : vector<16x128xf32>
    %316 = math.tanh %315 : vector<16x128xf32>
    %317 = arith.mulf %312, %316 : vector<16x128xf32>
    %318 = arith.addi %13, %c6_i32 : i32
    %c1_i32_109 = arith.constant 1 : i32
    %319 = arith.addi %318, %c1_i32_109 : i32
    %320 = vector.broadcast %319 : i32 to vector<16x1xi32>
    %321 = arith.cmpi eq, %11, %320 : vector<16x1xi32>
    %322 = vector.shape_cast %321 : vector<16x1xi1> to vector<16x1xi1>
    %323 = vector.broadcast %322 : vector<16x1xi1> to vector<16x128xi1>
    %324 = arith.select %323, %317, %280 : vector<16x128xi1>, vector<16x128xf32>
    %c7_i32 = arith.constant 7 : i32
    %c16_i32_110 = arith.constant 16 : i32
    %325 = arith.muli %c7_i32, %c16_i32_110 : i32
    %326 = tpu.assume_multiple %325, 16 : i32
    %327 = arith.index_cast %326 : i32 to index
    %c0_111 = arith.constant 0 : index
    %328 = vector.load %arg8[%327, %c0_111] : memref<128x512xf32, #tpu.memory_space<vmem>>, vector<16x512xf32>
    %cst_112 = arith.constant dense<0.000000e+00> : vector<16x512xf32>
    %329 = tpu.matmul %317, %12, %cst_112 {dimension_numbers = #tpu.dot_dimension_numbers<[1], [0], [0], [1], [0, 0, 1, 1], [], []>} : vector<16x128xf32>, vector<128x512xf32>, vector<16x512xf32> -> vector<16x512xf32>
    %330 = arith.addf %328, %329 : vector<16x512xf32>
    %331 = vector.extract_strided_slice %330 {offsets = [0, 0], sizes = [16, 128], strides = [1, 1]} : vector<16x512xf32> to vector<16x128xf32>
    %cst_113 = arith.constant 5.000000e-01 : f32
    %332 = vector.broadcast %cst_113 : f32 to vector<16x128xf32>
    %333 = arith.mulf %332, %331 : vector<16x128xf32>
    %334 = math.tanh %333 : vector<16x128xf32>
    %cst_114 = arith.constant 1.000000e+00 : f32
    %335 = vector.broadcast %cst_114 : f32 to vector<16x128xf32>
    %336 = arith.addf %334, %335 : vector<16x128xf32>
    %cst_115 = arith.constant 5.000000e-01 : f32
    %337 = vector.broadcast %cst_115 : f32 to vector<16x128xf32>
    %338 = arith.mulf %337, %336 : vector<16x128xf32>
    %339 = vector.extract_strided_slice %330 {offsets = [0, 128], sizes = [16, 128], strides = [1, 1]} : vector<16x512xf32> to vector<16x128xf32>
    %cst_116 = arith.constant 5.000000e-01 : f32
    %340 = vector.broadcast %cst_116 : f32 to vector<16x128xf32>
    %341 = arith.mulf %340, %339 : vector<16x128xf32>
    %342 = math.tanh %341 : vector<16x128xf32>
    %cst_117 = arith.constant 1.000000e+00 : f32
    %343 = vector.broadcast %cst_117 : f32 to vector<16x128xf32>
    %344 = arith.addf %342, %343 : vector<16x128xf32>
    %cst_118 = arith.constant 5.000000e-01 : f32
    %345 = vector.broadcast %cst_118 : f32 to vector<16x128xf32>
    %346 = arith.mulf %345, %344 : vector<16x128xf32>
    %347 = vector.extract_strided_slice %330 {offsets = [0, 256], sizes = [16, 128], strides = [1, 1]} : vector<16x512xf32> to vector<16x128xf32>
    %348 = math.tanh %347 : vector<16x128xf32>
    %349 = vector.extract_strided_slice %330 {offsets = [0, 384], sizes = [16, 128], strides = [1, 1]} : vector<16x512xf32> to vector<16x128xf32>
    %cst_119 = arith.constant 5.000000e-01 : f32
    %350 = vector.broadcast %cst_119 : f32 to vector<16x128xf32>
    %351 = arith.mulf %350, %349 : vector<16x128xf32>
    %352 = math.tanh %351 : vector<16x128xf32>
    %cst_120 = arith.constant 1.000000e+00 : f32
    %353 = vector.broadcast %cst_120 : f32 to vector<16x128xf32>
    %354 = arith.addf %352, %353 : vector<16x128xf32>
    %cst_121 = arith.constant 5.000000e-01 : f32
    %355 = vector.broadcast %cst_121 : f32 to vector<16x128xf32>
    %356 = arith.mulf %355, %354 : vector<16x128xf32>
    %357 = arith.mulf %346, %315 : vector<16x128xf32>
    %358 = arith.mulf %338, %348 : vector<16x128xf32>
    %359 = arith.addf %357, %358 : vector<16x128xf32>
    %360 = math.tanh %359 : vector<16x128xf32>
    %361 = arith.mulf %356, %360 : vector<16x128xf32>
    %362 = arith.addi %13, %c7_i32 : i32
    %c1_i32_122 = arith.constant 1 : i32
    %363 = arith.addi %362, %c1_i32_122 : i32
    %364 = vector.broadcast %363 : i32 to vector<16x1xi32>
    %365 = arith.cmpi eq, %11, %364 : vector<16x1xi32>
    %366 = vector.shape_cast %365 : vector<16x1xi1> to vector<16x1xi1>
    %367 = vector.broadcast %366 : vector<16x1xi1> to vector<16x128xi1>
    %368 = arith.select %367, %361, %324 : vector<16x128xi1>, vector<16x128xf32>
    %c8_i32_123 = arith.constant 8 : i32
    %c0_124 = arith.constant 0 : index
    %c0_125 = arith.constant 0 : index
    %369 = vector.load %arg9[%c0_124, %c0_125] : memref<16x128xf32, #tpu.memory_space<vmem>>, vector<16x128xf32>
    tpu.vector_store %arg9[%c0_124, %c0_125], %361 {strides = array<i32>} : memref<16x128xf32, #tpu.memory_space<vmem>>, vector<16x128xf32>,
    %c0_126 = arith.constant 0 : index
    %c0_127 = arith.constant 0 : index
    %370 = vector.load %arg10[%c0_126, %c0_127] : memref<16x128xf32, #tpu.memory_space<vmem>>, vector<16x128xf32>
    tpu.vector_store %arg10[%c0_126, %c0_127], %359 {strides = array<i32>} : memref<16x128xf32, #tpu.memory_space<vmem>>, vector<16x128xf32>,
    %c0_128 = arith.constant 0 : index
    %c0_129 = arith.constant 0 : index
    %371 = vector.load %arg7[%c0_128, %c0_129] : memref<16x128xf32, #tpu.memory_space<vmem>>, vector<16x128xf32>
    tpu.vector_store %arg7[%c0_128, %c0_129], %368 {strides = array<i32>} : memref<16x128xf32, #tpu.memory_space<vmem>>, vector<16x128xf32>,
    return
  }
  func.func @transform_0(%arg0: i32, %arg1: i32) -> (i32, i32, i32) {
    %c0_i32 = arith.constant 0 : i32
    %c0_i32_0 = arith.constant 0 : i32
    return %arg1, %arg0, %c0_i32 : i32, i32, i32
  }
  func.func @transform_1(%arg0: i32, %arg1: i32) -> (i32, i32) {
    %c0_i32 = arith.constant 0 : i32
    %c0_i32_0 = arith.constant 0 : i32
    return %arg0, %c0_i32 : i32, i32
  }
  func.func @transform_2(%arg0: i32, %arg1: i32) -> (i32, i32) {
    %c0_i32 = arith.constant 0 : i32
    %c0_i32_0 = arith.constant 0 : i32
    %c0_i32_1 = arith.constant 0 : i32
    return %c0_i32, %c0_i32_0 : i32, i32
  }
  func.func @transform_3(%arg0: i32, %arg1: i32) -> (i32, i32) {
    %c0_i32 = arith.constant 0 : i32
    %c0_i32_0 = arith.constant 0 : i32
    %c0_i32_1 = arith.constant 0 : i32
    return %c0_i32, %c0_i32_0 : i32, i32
  }
  func.func @transform_4(%arg0: i32, %arg1: i32) -> (i32, i32) {
    %c0_i32 = arith.constant 0 : i32
    %c0_i32_0 = arith.constant 0 : i32
    %c0_i32_1 = arith.constant 0 : i32
    return %c0_i32, %c0_i32_0 : i32, i32
  }
  func.func @transform_5(%arg0: i32, %arg1: i32) -> (i32, i32) {
    %c0_i32 = arith.constant 0 : i32
    %c0_i32_0 = arith.constant 0 : i32
    return %arg0, %c0_i32 : i32, i32
  }
}

</mosaic_0001>

<llo_original>
// kernel: tpu_custom_call.1
$region0: #{tpu_custom_call.1}
  #allocation0 [shape = 'u32[]', space=smem, size = 0x4, offset = 0x4, fixed_abs, tag = 'smem constant byte address 0x4 - core index']
  #allocation1 [shape = 'u32[72,128]{1,0:T(1,128)}', space=vmem, size = 0x9000, scoped, tag = 'internal scratch']
  #allocation2 [shape = 'f32[128,512]{1,0:T(8,128)}', space=vmem, size = 0x40000, scoped, tag = 'scratch operand']
  #allocation3 [shape = 'f32[16,128]{1,0:T(8,128)}', space=vmem, size = 0x2000, scoped, tag = 'scratch operand']
  #allocation4 [shape = 'f32[16,128]{1,0:T(8,128)}', space=vmem, size = 0x2000, scoped, tag = 'scratch operand']
  %s0 = inlined_call_operand.hbm [shape: f32[8,16,128], index: 0, kind: input, shape index: {}]
  %s1 = inlined_call_operand.vmem [shape: s32[16,1], index: 1, kind: input, shape index: {}]
  %s2 = inlined_call_operand.hbm [shape: f32[128,512], index: 2, kind: input, shape index: {}]
  %s3 = inlined_call_operand.hbm [shape: f32[128,512], index: 3, kind: input, shape index: {}]
  %s4 = inlined_call_operand.vmem [shape: f32[1,512], index: 4, kind: input, shape index: {}]
  %s5 = inlined_call_operand.hbm [shape: f32[16,128], index: 5, kind: output, shape index: {}]
  %s6 = sld [smem:[#allocation0]]
  $region46: #{tpu_custom_call.1} parent=0
    _
  %s8 = ssub.s32 1, %s6
  %s9 = scalar_select 0, %s8, %s6
  $region1: #{tpu_custom_call.1} parent=0
    #allocation5 [shape = 'u8[65536]{0}', space=vmem, size = 0x10000, scoped, tag = 'input window, operand 0, single buffered']
    #allocation6 [shape = 's32[1]{0}', space=sflag, size = 0x4, scoped, tag = 'scoped memory for tpu_custom_call.1']
    #allocation7 [shape = 's32[1]{0}', space=sflag, size = 0x4, scoped, tag = 'scoped memory for tpu_custom_call.1']
    #allocation8 [shape = 'u8[262144]{0}', space=vmem, size = 0x40000, scoped, tag = 'input window, operand 2, single buffered']
    #allocation9 [shape = 's32[1]{0}', space=sflag, size = 0x4, scoped, tag = 'scoped memory for tpu_custom_call.1']
    #allocation10 [shape = 'u8[262144]{0}', space=vmem, size = 0x40000, scoped, tag = 'input window, operand 3, single buffered']
    #allocation11 [shape = 'u8[8192]{0}', space=vmem, size = 0x2000, scoped, tag = 'output window, operand 0, single buffered']
    %10 = vsyncpa [#allocation6], 0
    %11 = vsyncpa [#allocation9], 0
    %12 = vsyncpa [#allocation7], 0
    // Predicated region
    $region2: #{tpu_custom_call.1} parent=1 // pred_check
      _
    $region3: #{tpu_custom_call.1} parent=1 // pred_check_branch
      %14 = sbr.rel (0) target = $region5
    $region4: #{tpu_custom_call.1} parent=1 // pred_region
      %16 = vsyncadd [#allocation6], 0
      %s17 = sshll.u32 %s0, 4
      %s18 = int_to_ptr.hbm [resolvable:$true] %s17
      %s19 = sshll.u32 [#allocation5], 4
      %s20 = int_to_ptr.vmem [resolvable:$true] %s19
      %25 = dma.hbm_to_vmem [thread:$0]  %s18, 2048, %s20, [#allocation6], 128, 128, 8
    $region5: #{tpu_custom_call.1} parent=1 // pred_fallthru
      _
    // Predicated region
    $region6: #{tpu_custom_call.1} parent=1 // pred_check
      _
    $region7: #{tpu_custom_call.1} parent=1 // pred_check_branch
      %27 = sbr.rel (0) target = $region9
    $region8: #{tpu_custom_call.1} parent=1 // pred_region
      _
    $region9: #{tpu_custom_call.1} parent=1 // pred_fallthru
      _
    // Predicated region
    $region10: #{tpu_custom_call.1} parent=1 // pred_check
      _
    $region11: #{tpu_custom_call.1} parent=1 // pred_check_branch
      %29 = sbr.rel (0) target = $region13
    $region12: #{tpu_custom_call.1} parent=1 // pred_region
      %31 = vsyncadd [#allocation9], 0
      %s32 = sshll.u32 %s2, 4
      %s33 = int_to_ptr.hbm [resolvable:$true] %s32
      %s34 = sshll.u32 [#allocation8], 4
      %s35 = int_to_ptr.vmem [resolvable:$true] %s34
      %40 = dma.hbm_to_vmem [thread:$0]  %s33, 8192, %s35, [#allocation9], 512, 512, 32
    $region13: #{tpu_custom_call.1} parent=1 // pred_fallthru
      _
    // Predicated region
    $region14: #{tpu_custom_call.1} parent=1 // pred_check
      _
    $region15: #{tpu_custom_call.1} parent=1 // pred_check_branch
      %42 = sbr.rel (0) target = $region17
    $region16: #{tpu_custom_call.1} parent=1 // pred_region
      %44 = vsyncadd [#allocation9], 0
      %s45 = sshll.u32 %s3, 4
      %s46 = int_to_ptr.hbm [resolvable:$true] %s45
      %s47 = sshll.u32 [#allocation10], 4
      %s48 = int_to_ptr.vmem [resolvable:$true] %s47
      %53 = dma.hbm_to_vmem [thread:$0]  %s46, 8192, %s48, [#allocation9], 512, 512, 32
    $region17: #{tpu_custom_call.1} parent=1 // pred_fallthru
      _
    // Predicated region
    $region18: #{tpu_custom_call.1} parent=1 // pred_check
      _
    $region19: #{tpu_custom_call.1} parent=1 // pred_check_branch
      %55 = sbr.rel (0) target = $region21
    $region20: #{tpu_custom_call.1} parent=1 // pred_region
      _
    $region21: #{tpu_custom_call.1} parent=1 // pred_fallthru
      _
    // Predicated region
    $region22: #{tpu_custom_call.1} parent=1 // pred_check
      _
    $region23: #{tpu_custom_call.1} parent=1 // pred_check_branch
      %57 = sbr.rel (0) target = $region25
    $region24: #{tpu_custom_call.1} parent=1 // pred_region
      %59 = dma.done [#allocation6], 2048
    $region25: #{tpu_custom_call.1} parent=1 // pred_fallthru
      _
    // Predicated region
    $region26: #{tpu_custom_call.1} parent=1 // pred_check
      _
    $region27: #{tpu_custom_call.1} parent=1 // pred_check_branch
      %61 = sbr.rel (0) target = $region29
    $region28: #{tpu_custom_call.1} parent=1 // pred_region
      %63 = dma.done [#allocation9], 8192
    $region29: #{tpu_custom_call.1} parent=1 // pred_fallthru
      _
    // Predicated region
    $region30: #{tpu_custom_call.1} parent=1 // pred_check
      _
    $region31: #{tpu_custom_call.1} parent=1 // pred_check_branch
      %65 = sbr.rel (0) target = $region33
    $region32: #{tpu_custom_call.1} parent=1 // pred_region
      %67 = dma.done [#allocation9], 8192
    $region33: #{tpu_custom_call.1} parent=1 // pred_fallthru
      _
    %p68 = scmp.eq.s32.totalorder 0, 0
    // Predicated region
    $region34: #{tpu_custom_call.1} parent=1 // pred_check
      %p69 = pneg %p68
    $region35: #{tpu_custom_call.1} parent=1 // pred_check_branch
      %71 = sbr.rel (%p69) target = $region37
    $region36: #{tpu_custom_call.1} parent=1 // pred_region
      %72 = vst [vmem:[#allocation3] sm:$0xff] 0.0
      %73 = vst [vmem:[#allocation3 + $0x8] sm:$0xff] 0.0
      %74 = vst [vmem:[#allocation4] sm:$0xff] 0.0
      %75 = vst [vmem:[#allocation4 + $0x8] sm:$0xff] 0.0
      %76 = vst [vmem:[#allocation11] sm:$0xff] 0.0
      %77 = vst [vmem:[#allocation11 + $0x8] sm:$0xff] 0.0
    $region37: #{tpu_custom_call.1} parent=1 // pred_fallthru
      _
    %v78 = vld [vmem:[#allocation5] sm:$0xff]
    %v79 = vld [vmem:[#allocation5 + $0x8] sm:$0xff]
    %v80 = vld [vmem:[#allocation5 + $0x10] sm:$0xff]
    %v81 = vld [vmem:[#allocation5 + $0x18] sm:$0xff]
    %v82 = vld [vmem:[#allocation5 + $0x20] sm:$0xff]
    %v83 = vld [vmem:[#allocation5 + $0x28] sm:$0xff]
    %v84 = vld [vmem:[#allocation5 + $0x30] sm:$0xff]
    %v85 = vld [vmem:[#allocation5 + $0x38] sm:$0xff]
    %v86 = vld [vmem:[#allocation5 + $0x40] sm:$0xff]
    %v87 = vld [vmem:[#allocation5 + $0x48] sm:$0xff]
    %v88 = vld [vmem:[#allocation5 + $0x50] sm:$0xff]
    %v89 = vld [vmem:[#allocation5 + $0x58] sm:$0xff]
    %v90 = vld [vmem:[#allocation5 + $0x60] sm:$0xff]
    %v91 = vld [vmem:[#allocation5 + $0x68] sm:$0xff]
    %v92 = vld [vmem:[#allocation5 + $0x70] sm:$0xff]
    %v93 = vld [vmem:[#allocation5 + $0x78] sm:$0xff]
    %v94 = vld [vmem:[#allocation8] sm:$0xff]
    %v95 = vld [vmem:[#allocation8 + $0x8] sm:$0xff]
    %v96 = vld [vmem:[#allocation8 + $0x10] sm:$0xff]
    %v97 = vld [vmem:[#allocation8 + $0x18] sm:$0xff]
    %v98 = vld [vmem:[#allocation8 + $0x20] sm:$0xff]
    %v99 = vld [vmem:[#allocation8 + $0x28] sm:$0xff]
    %v100 = vld [vmem:[#allocation8 + $0x30] sm:$0xff]
    %v101 = vld [vmem:[#allocation8 + $0x38] sm:$0xff]
    %v102 = vld [vmem:[#allocation8 + $0x40] sm:$0xff]
    %v103 = vld [vmem:[#allocation8 + $0x48] sm:$0xff]
    %v104 = vld [vmem:[#allocation8 + $0x50] sm:$0xff]
    %v105 = vld [vmem:[#allocation8 + $0x58] sm:$0xff]
    %v106 = vld [vmem:[#allocation8 + $0x60] sm:$0xff]
    %v107 = vld [vmem:[#allocation8 + $0x68] sm:$0xff]
    %v108 = vld [vmem:[#allocation8 + $0x70] sm:$0xff]
    %v109 = vld [vmem:[#allocation8 + $0x78] sm:$0xff]
    %v110 = vld [vmem:[#allocation8 + $0x80] sm:$0xff]
    %v111 = vld [vmem:[#allocation8 + $0x88] sm:$0xff]
    %v112 = vld [vmem:[#allocation8 + $0x90] sm:$0xff]
    %v113 = vld [vmem:[#allocation8 + $0x98] sm:$0xff]
    %v114 = vld [vmem:[#allocation8 + $0xa0] sm:$0xff]
    %v115 = vld [vmem:[#allocation8 + $0xa8] sm:$0xff]
    %v116 = vld [vmem:[#allocation8 + $0xb0] sm:$0xff]
    %v117 = vld [vmem:[#allocation8 + $0xb8] sm:$0xff]
    %v118 = vld [vmem:[#allocation8 + $0xc0] sm:$0xff]
    %v119 = vld [vmem:[#allocation8 + $0xc8] sm:$0xff]
    %v120 = vld [vmem:[#allocation8 + $0xd0] sm:$0xff]
    %v121 = vld [vmem:[#allocation8 + $0xd8] sm:$0xff]
    %v122 = vld [vmem:[#allocation8 + $0xe0] sm:$0xff]
    %v123 = vld [vmem:[#allocation8 + $0xe8] sm:$0xff]
    %v124 = vld [vmem:[#allocation8 + $0xf0] sm:$0xff]
    %v125 = vld [vmem:[#allocation8 + $0xf8] sm:$0xff]
    %v126 = vld [vmem:[#allocation8 + $0x100] sm:$0xff]
    %v127 = vld [vmem:[#allocation8 + $0x108] sm:$0xff]
    %v128 = vld [vmem:[#allocation8 + $0x110] sm:$0xff]
    %v129 = vld [vmem:[#allocation8 + $0x118] sm:$0xff]
    %v130 = vld [vmem:[#allocation8 + $0x120] sm:$0xff]
    %v131 = vld [vmem:[#allocation8 + $0x128] sm:$0xff]
    %v132 = vld [vmem:[#allocation8 + $0x130] sm:$0xff]
    %v133 = vld [vmem:[#allocation8 + $0x138] sm:$0xff]
    %v134 = vld [vmem:[#allocation8 + $0x140] sm:$0xff]
    %v135 = vld [vmem:[#allocation8 + $0x148] sm:$0xff]
    %v136 = vld [vmem:[#allocation8 + $0x150] sm:$0xff]
    %v137 = vld [vmem:[#allocation8 + $0x158] sm:$0xff]
    %v138 = vld [vmem:[#allocation8 + $0x160] sm:$0xff]
    %v139 = vld [vmem:[#allocation8 + $0x168] sm:$0xff]
    %v140 = vld [vmem:[#allocation8 + $0x170] sm:$0xff]
    %v141 = vld [vmem:[#allocation8 + $0x178] sm:$0xff]
    %v142 = vld [vmem:[#allocation8 + $0x180] sm:$0xff]
    %v143 = vld [vmem:[#allocation8 + $0x188] sm:$0xff]
    %v144 = vld [vmem:[#allocation8 + $0x190] sm:$0xff]
    %v145 = vld [vmem:[#allocation8 + $0x198] sm:$0xff]
    %v146 = vld [vmem:[#allocation8 + $0x1a0] sm:$0xff]
    %v147 = vld [vmem:[#allocation8 + $0x1a8] sm:$0xff]
    %v148 = vld [vmem:[#allocation8 + $0x1b0] sm:$0xff]
    %v149 = vld [vmem:[#allocation8 + $0x1b8] sm:$0xff]
    %v150 = vld [vmem:[#allocation8 + $0x1c0] sm:$0xff]
    %v151 = vld [vmem:[#allocation8 + $0x1c8] sm:$0xff]
    %v152 = vld [vmem:[#allocation8 + $0x1d0] sm:$0xff]
    %v153 = vld [vmem:[#allocation8 + $0x1d8] sm:$0xff]
    %v154 = vld [vmem:[#allocation8 + $0x1e0] sm:$0xff]
    %v155 = vld [vmem:[#allocation8 + $0x1e8] sm:$0xff]
    %v156 = vld [vmem:[#allocation8 + $0x1f0] sm:$0xff]
    %v157 = vld [vmem:[#allocation8 + $0x1f8] sm:$0xff]
    %v158 = vld [vmem:[%s4] sm:$0xf]
    %v160 = vperm.slane %v158, 0
    %v161 = vperm.slane %v158, 1
    %v162 = vperm.slane %v158, 2
    %v163 = vperm.slane %v158, 3
    %168 = vmatpush.msra.mxu0 %v154
    %169 = vmatpush.msra.mxu0 %v150
    %170 = vmatpush.msra.mxu0 %v146
    %171 = vmatpush.msra.mxu0 %v142
    %172 = vmatpush.msra.mxu0 %v138
    %173 = vmatpush.msra.mxu0 %v134
    %174 = vmatpush.msra.mxu0 %v130
    %175 = vmatpush.msra.mxu0 %v126
    %176 = vmatpush.msra.mxu0 %v122
    %177 = vmatpush.msra.mxu0 %v118
    %178 = vmatpush.msra.mxu0 %v114
    %179 = vmatpush.msra.mxu0 %v110
    %180 = vmatpush.msra.mxu0 %v106
    %181 = vmatpush.msra.mxu0 %v102
    %182 = vmatpush.msra.mxu0 %v98
    %183 = vmatpush.msra.mxu0 %v94
    %184 = vmatmul.f32.gmra.mxu0 %v78
    %v185 = vpop.f32.mrf.mxu0
    %v186 = vadd.f32 %v160, %v185
    %187 = vmatmul.f32.gmra.mxu0 %v79
    %v188 = vpop.f32.mrf.mxu0
    %v189 = vadd.f32 %v160, %v188
    %190 = vmatmul.f32.gmra.mxu0 %v80
    %v191 = vpop.f32.mrf.mxu0
    %v192 = vadd.f32 %v160, %v191
    %193 = vmatmul.f32.gmra.mxu0 %v81
    %v194 = vpop.f32.mrf.mxu0
    %v195 = vadd.f32 %v160, %v194
    %196 = vmatmul.f32.gmra.mxu0 %v82
    %v197 = vpop.f32.mrf.mxu0
    %v198 = vadd.f32 %v160, %v197
    %199 = vmatmul.f32.gmra.mxu0 %v83
    %v200 = vpop.f32.mrf.mxu0
    %v201 = vadd.f32 %v160, %v200
    %202 = vmatmul.f32.gmra.mxu0 %v84
    %v203 = vpop.f32.mrf.mxu0
    %v204 = vadd.f32 %v160, %v203
    %205 = vmatmul.f32.gmra.mxu0 %v85
    %v206 = vpop.f32.mrf.mxu0
    %v207 = vadd.f32 %v160, %v206
    %208 = vmatmul.f32.gmra.mxu0 %v86
    %v209 = vpop.f32.mrf.mxu0
    %v210 = vadd.f32 %v160, %v209
    %211 = vmatmul.f32.gmra.mxu0 %v87
    %v212 = vpop.f32.mrf.mxu0
    %v213 = vadd.f32 %v160, %v212
    %214 = vmatmul.f32.gmra.mxu0 %v88
    %v215 = vpop.f32.mrf.mxu0
    %v216 = vadd.f32 %v160, %v215
    %217 = vmatmul.f32.gmra.mxu0 %v89
    %v218 = vpop.f32.mrf.mxu0
    %v219 = vadd.f32 %v160, %v218
    %220 = vmatmul.f32.gmra.mxu0 %v90
    %v221 = vpop.f32.mrf.mxu0
    %v222 = vadd.f32 %v160, %v221
    %223 = vmatmul.f32.gmra.mxu0 %v91
    %v224 = vpop.f32.mrf.mxu0
    %v225 = vadd.f32 %v160, %v224
    %226 = vmatmul.f32.gmra.mxu0 %v92
    %v227 = vpop.f32.mrf.mxu0
    %v228 = vadd.f32 %v160, %v227
    %229 = vmatmul.f32.gmra.mxu0 %v93
    %v230 = vpop.f32.mrf.mxu0
    %v231 = vadd.f32 %v160, %v230
    %232 = vdwg.mxu0
    %233 = vmatpush.msra.mxu0 %v155
    %234 = vmatpush.msra.mxu0 %v151
    %235 = vmatpush.msra.mxu0 %v147
    %236 = vmatpush.msra.mxu0 %v143
    %237 = vmatpush.msra.mxu0 %v139
    %238 = vmatpush.msra.mxu0 %v135
    %239 = vmatpush.msra.mxu0 %v131
    %240 = vmatpush.msra.mxu0 %v127
    %241 = vmatpush.msra.mxu0 %v123
    %242 = vmatpush.msra.mxu0 %v119
    %243 = vmatpush.msra.mxu0 %v115
    %244 = vmatpush.msra.mxu0 %v111
    %245 = vmatpush.msra.mxu0 %v107
    %246 = vmatpush.msra.mxu0 %v103
    %247 = vmatpush.msra.mxu0 %v99
    %248 = vmatpush.msra.mxu0 %v95
    %249 = vmatmul.f32.gmra.mxu0 %v78
    %v250 = vpop.f32.mrf.mxu0
    %v251 = vadd.f32 %v161, %v250
    %252 = vmatmul.f32.gmra.mxu0 %v79
    %v253 = vpop.f32.mrf.mxu0
    %v254 = vadd.f32 %v161, %v253
    %255 = vmatmul.f32.gmra.mxu0 %v80
    %v256 = vpop.f32.mrf.mxu0
    %v257 = vadd.f32 %v161, %v256
    %258 = vmatmul.f32.gmra.mxu0 %v81
    %v259 = vpop.f32.mrf.mxu0
    %v260 = vadd.f32 %v161, %v259
    %261 = vmatmul.f32.gmra.mxu0 %v82
    %v262 = vpop.f32.mrf.mxu0
    %v263 = vadd.f32 %v161, %v262
    %264 = vmatmul.f32.gmra.mxu0 %v83
    %v265 = vpop.f32.mrf.mxu0
    %v266 = vadd.f32 %v161, %v265
    %267 = vmatmul.f32.gmra.mxu0 %v84
    %v268 = vpop.f32.mrf.mxu0
    %v269 = vadd.f32 %v161, %v268
    %270 = vmatmul.f32.gmra.mxu0 %v85
    %v271 = vpop.f32.mrf.mxu0
    %v272 = vadd.f32 %v161, %v271
    %273 = vmatmul.f32.gmra.mxu0 %v86
    %v274 = vpop.f32.mrf.mxu0
    %v275 = vadd.f32 %v161, %v274
    %276 = vmatmul.f32.gmra.mxu0 %v87
    %v277 = vpop.f32.mrf.mxu0
    %v278 = vadd.f32 %v161, %v277
    %279 = vmatmul.f32.gmra.mxu0 %v88
    %v280 = vpop.f32.mrf.mxu0
    %v281 = vadd.f32 %v161, %v280
    %282 = vmatmul.f32.gmra.mxu0 %v89
    %v283 = vpop.f32.mrf.mxu0
    %v284 = vadd.f32 %v161, %v283
    %285 = vmatmul.f32.gmra.mxu0 %v90
    %v286 = vpop.f32.mrf.mxu0
    %v287 = vadd.f32 %v161, %v286
    %288 = vmatmul.f32.gmra.mxu0 %v91
    %v289 = vpop.f32.mrf.mxu0
    %v290 = vadd.f32 %v161, %v289
    %291 = vmatmul.f32.gmra.mxu0 %v92
    %v292 = vpop.f32.mrf.mxu0
    %v293 = vadd.f32 %v161, %v292
    %294 = vmatmul.f32.gmra.mxu0 %v93
    %v295 = vpop.f32.mrf.mxu0
    %v296 = vadd.f32 %v161, %v295
    %297 = vdwg.mxu0
    %298 = vmatpush.msra.mxu0 %v156
    %299 = vmatpush.msra.mxu0 %v152
    %300 = vmatpush.msra.mxu0 %v148
    %301 = vmatpush.msra.mxu0 %v144
    %302 = vmatpush.msra.mxu0 %v140
    %303 = vmatpush.msra.mxu0 %v136
    %304 = vmatpush.msra.mxu0 %v132
    %305 = vmatpush.msra.mxu0 %v128
    %306 = vmatpush.msra.mxu0 %v124
    %307 = vmatpush.msra.mxu0 %v120
    %308 = vmatpush.msra.mxu0 %v116
    %309 = vmatpush.msra.mxu0 %v112
    %310 = vmatpush.msra.mxu0 %v108
    %311 = vmatpush.msra.mxu0 %v104
    %312 = vmatpush.msra.mxu0 %v100
    %313 = vmatpush.msra.mxu0 %v96
    %314 = vmatmul.f32.gmra.mxu0 %v78
    %v315 = vpop.f32.mrf.mxu0
    %v316 = vadd.f32 %v162, %v315
    %317 = vmatmul.f32.gmra.mxu0 %v79
    %v318 = vpop.f32.mrf.mxu0
    %v319 = vadd.f32 %v162, %v318
    %320 = vmatmul.f32.gmra.mxu0 %v80
    %v321 = vpop.f32.mrf.mxu0
    %v322 = vadd.f32 %v162, %v321
    %323 = vmatmul.f32.gmra.mxu0 %v81
    %v324 = vpop.f32.mrf.mxu0
    %v325 = vadd.f32 %v162, %v324
    %326 = vmatmul.f32.gmra.mxu0 %v82
    %v327 = vpop.f32.mrf.mxu0
    %v328 = vadd.f32 %v162, %v327
    %329 = vmatmul.f32.gmra.mxu0 %v83
    %v330 = vpop.f32.mrf.mxu0
    %v331 = vadd.f32 %v162, %v330
    %332 = vmatmul.f32.gmra.mxu0 %v84
    %v333 = vpop.f32.mrf.mxu0
    %v334 = vadd.f32 %v162, %v333
    %335 = vmatmul.f32.gmra.mxu0 %v85
    %v336 = vpop.f32.mrf.mxu0
    %v337 = vadd.f32 %v162, %v336
    %338 = vmatmul.f32.gmra.mxu0 %v86
    %v339 = vpop.f32.mrf.mxu0
    %v340 = vadd.f32 %v162, %v339
    %341 = vmatmul.f32.gmra.mxu0 %v87
    %v342 = vpop.f32.mrf.mxu0
    %v343 = vadd.f32 %v162, %v342
    %344 = vmatmul.f32.gmra.mxu0 %v88
    %v345 = vpop.f32.mrf.mxu0
    %v346 = vadd.f32 %v162, %v345
    %347 = vmatmul.f32.gmra.mxu0 %v89
    %v348 = vpop.f32.mrf.mxu0
    %v349 = vadd.f32 %v162, %v348
    %350 = vmatmul.f32.gmra.mxu0 %v90
    %v351 = vpop.f32.mrf.mxu0
    %v352 = vadd.f32 %v162, %v351
    %353 = vmatmul.f32.gmra.mxu0 %v91
    %v354 = vpop.f32.mrf.mxu0
    %v355 = vadd.f32 %v162, %v354
    %356 = vmatmul.f32.gmra.mxu0 %v92
    %v357 = vpop.f32.mrf.mxu0
    %v358 = vadd.f32 %v162, %v357
    %359 = vmatmul.f32.gmra.mxu0 %v93
    %v360 = vpop.f32.mrf.mxu0
    %v361 = vadd.f32 %v162, %v360
    %362 = vdwg.mxu0
    %363 = vmatpush.msra.mxu0 %v157
    %364 = vmatpush.msra.mxu0 %v153
    %365 = vmatpush.msra.mxu0 %v149
    %366 = vmatpush.msra.mxu0 %v145
    %367 = vmatpush.msra.mxu0 %v141
    %368 = vmatpush.msra.mxu0 %v137
    %369 = vmatpush.msra.mxu0 %v133
    %370 = vmatpush.msra.mxu0 %v129
    %371 = vmatpush.msra.mxu0 %v125
    %372 = vmatpush.msra.mxu0 %v121
    %373 = vmatpush.msra.mxu0 %v117
    %374 = vmatpush.msra.mxu0 %v113
    %375 = vmatpush.msra.mxu0 %v109
    %376 = vmatpush.msra.mxu0 %v105
    %377 = vmatpush.msra.mxu0 %v101
    %378 = vmatpush.msra.mxu0 %v97
    %379 = vmatmul.f32.gmra.mxu0 %v78
    %v380 = vpop.f32.mrf.mxu0
    %v381 = vadd.f32 %v163, %v380
    %382 = vmatmul.f32.gmra.mxu0 %v79
    %v383 = vpop.f32.mrf.mxu0
    %v384 = vadd.f32 %v163, %v383
    %385 = vmatmul.f32.gmra.mxu0 %v80
    %v386 = vpop.f32.mrf.mxu0
    %v387 = vadd.f32 %v163, %v386
    %388 = vmatmul.f32.gmra.mxu0 %v81
    %v389 = vpop.f32.mrf.mxu0
    %v390 = vadd.f32 %v163, %v389
    %391 = vmatmul.f32.gmra.mxu0 %v82
    %v392 = vpop.f32.mrf.mxu0
    %v393 = vadd.f32 %v163, %v392
    %394 = vmatmul.f32.gmra.mxu0 %v83
    %v395 = vpop.f32.mrf.mxu0
    %v396 = vadd.f32 %v163, %v395
    %397 = vmatmul.f32.gmra.mxu0 %v84
    %v398 = vpop.f32.mrf.mxu0
    %v399 = vadd.f32 %v163, %v398
    %400 = vmatmul.f32.gmra.mxu0 %v85
    %v401 = vpop.f32.mrf.mxu0
    %v402 = vadd.f32 %v163, %v401
    %403 = vmatmul.f32.gmra.mxu0 %v86
    %v404 = vpop.f32.mrf.mxu0
    %v405 = vadd.f32 %v163, %v404
    %406 = vmatmul.f32.gmra.mxu0 %v87
    %v407 = vpop.f32.mrf.mxu0
    %v408 = vadd.f32 %v163, %v407
    %409 = vmatmul.f32.gmra.mxu0 %v88
    %v410 = vpop.f32.mrf.mxu0
    %v411 = vadd.f32 %v163, %v410
    %412 = vmatmul.f32.gmra.mxu0 %v89
    %v413 = vpop.f32.mrf.mxu0
    %v414 = vadd.f32 %v163, %v413
    %415 = vmatmul.f32.gmra.mxu0 %v90
    %v416 = vpop.f32.mrf.mxu0
    %v417 = vadd.f32 %v163, %v416
    %418 = vmatmul.f32.gmra.mxu0 %v91
    %v419 = vpop.f32.mrf.mxu0
    %v420 = vadd.f32 %v163, %v419
    %421 = vmatmul.f32.gmra.mxu0 %v92
    %v422 = vpop.f32.mrf.mxu0
    %v423 = vadd.f32 %v163, %v422
    %424 = vmatmul.f32.gmra.mxu0 %v93
    %v425 = vpop.f32.mrf.mxu0
    %v426 = vadd.f32 %v163, %v425
    %427 = vdwg.mxu0
    %428 = vst [vmem:[#allocation2] sm:$0xff] %v186
    %429 = vst [vmem:[#allocation2 + $0x8] sm:$0xff] %v251
    %430 = vst [vmem:[#allocation2 + $0x10] sm:$0xff] %v316
    %431 = vst [vmem:[#allocation2 + $0x18] sm:$0xff] %v381
    %432 = vst [vmem:[#allocation2 + $0x20] sm:$0xff] %v189
    %433 = vst [vmem:[#allocation2 + $0x28] sm:$0xff] %v254
    %434 = vst [vmem:[#allocation2 + $0x30] sm:$0xff] %v319
    %435 = vst [vmem:[#allocation2 + $0x38] sm:$0xff] %v384
    %436 = vst [vmem:[#allocation2 + $0x40] sm:$0xff] %v192
    %437 = vst [vmem:[#allocation2 + $0x48] sm:$0xff] %v257
    %438 = vst [vmem:[#allocation2 + $0x50] sm:$0xff] %v322
    %439 = vst [vmem:[#allocation2 + $0x58] sm:$0xff] %v387
    %440 = vst [vmem:[#allocation2 + $0x60] sm:$0xff] %v195
    %441 = vst [vmem:[#allocation2 + $0x68] sm:$0xff] %v260
    %442 = vst [vmem:[#allocation2 + $0x70] sm:$0xff] %v325
    %443 = vst [vmem:[#allocation2 + $0x78] sm:$0xff] %v390
    %444 = vst [vmem:[#allocation2 + $0x80] sm:$0xff] %v198
    %445 = vst [vmem:[#allocation2 + $0x88] sm:$0xff] %v263
    %446 = vst [vmem:[#allocation2 + $0x90] sm:$0xff] %v328
    %447 = vst [vmem:[#allocation2 + $0x98] sm:$0xff] %v393
    %448 = vst [vmem:[#allocation2 + $0xa0] sm:$0xff] %v201
    %449 = vst [vmem:[#allocation2 + $0xa8] sm:$0xff] %v266
    %450 = vst [vmem:[#allocation2 + $0xb0] sm:$0xff] %v331
    %451 = vst [vmem:[#allocation2 + $0xb8] sm:$0xff] %v396
    %452 = vst [vmem:[#allocation2 + $0xc0] sm:$0xff] %v204
    %453 = vst [vmem:[#allocation2 + $0xc8] sm:$0xff] %v269
    %454 = vst [vmem:[#allocation2 + $0xd0] sm:$0xff] %v334
    %455 = vst [vmem:[#allocation2 + $0xd8] sm:$0xff] %v399
    %456 = vst [vmem:[#allocation2 + $0xe0] sm:$0xff] %v207
    %457 = vst [vmem:[#allocation2 + $0xe8] sm:$0xff] %v272
    %458 = vst [vmem:[#allocation2 + $0xf0] sm:$0xff] %v337
    %459 = vst [vmem:[#allocation2 + $0xf8] sm:$0xff] %v402
    %460 = vst [vmem:[#allocation2 + $0x100] sm:$0xff] %v210
    %461 = vst [vmem:[#allocation2 + $0x108] sm:$0xff] %v275
    %462 = vst [vmem:[#allocation2 + $0x110] sm:$0xff] %v340
    %463 = vst [vmem:[#allocation2 + $0x118] sm:$0xff] %v405
    %464 = vst [vmem:[#allocation2 + $0x120] sm:$0xff] %v213
    %465 = vst [vmem:[#allocation2 + $0x128] sm:$0xff] %v278
    %466 = vst [vmem:[#allocation2 + $0x130] sm:$0xff] %v343
    %467 = vst [vmem:[#allocation2 + $0x138] sm:$0xff] %v408
    %468 = vst [vmem:[#allocation2 + $0x140] sm:$0xff] %v216
    %469 = vst [vmem:[#allocation2 + $0x148] sm:$0xff] %v281
    %470 = vst [vmem:[#allocation2 + $0x150] sm:$0xff] %v346
    %471 = vst [vmem:[#allocation2 + $0x158] sm:$0xff] %v411
    %472 = vst [vmem:[#allocation2 + $0x160] sm:$0xff] %v219
    %473 = vst [vmem:[#allocation2 + $0x168] sm:$0xff] %v284
    %474 = vst [vmem:[#allocation2 + $0x170] sm:$0xff] %v349
    %475 = vst [vmem:[#allocation2 + $0x178] sm:$0xff] %v414
    %476 = vst [vmem:[#allocation2 + $0x180] sm:$0xff] %v222
    %477 = vst [vmem:[#allocation2 + $0x188] sm:$0xff] %v287
    %478 = vst [vmem:[#allocation2 + $0x190] sm:$0xff] %v352
    %479 = vst [vmem:[#allocation2 + $0x198] sm:$0xff] %v417
    %480 = vst [vmem:[#allocation2 + $0x1a0] sm:$0xff] %v225
    %481 = vst [vmem:[#allocation2 + $0x1a8] sm:$0xff] %v290
    %482 = vst [vmem:[#allocation2 + $0x1b0] sm:$0xff] %v355
    %483 = vst [vmem:[#allocation2 + $0x1b8] sm:$0xff] %v420
    %484 = vst [vmem:[#allocation2 + $0x1c0] sm:$0xff] %v228
    %485 = vst [vmem:[#allocation2 + $0x1c8] sm:$0xff] %v293
    %486 = vst [vmem:[#allocation2 + $0x1d0] sm:$0xff] %v358
    %487 = vst [vmem:[#allocation2 + $0x1d8] sm:$0xff] %v423
    %488 = vst [vmem:[#allocation2 + $0x1e0] sm:$0xff] %v231
    %489 = vst [vmem:[#allocation2 + $0x1e8] sm:$0xff] %v296
    %490 = vst [vmem:[#allocation2 + $0x1f0] sm:$0xff] %v361
    %491 = vst [vmem:[#allocation2 + $0x1f8] sm:$0xff] %v426
    %v492 = vld [vmem:[%s1] sm:$0xff]
    %v493 = vld [vmem:[%s1 + $0x8] sm:$0xff]
    %v494 = vld [vmem:[#allocation10] sm:$0xff]
    %v495 = vld [vmem:[#allocation10 + $0x8] sm:$0xff]
    %v496 = vld [vmem:[#allocation10 + $0x10] sm:$0xff]
    %v497 = vld [vmem:[#allocation10 + $0x18] sm:$0xff]
    %v498 = vld [vmem:[#allocation10 + $0x20] sm:$0xff]
    %v499 = vld [vmem:[#allocation10 + $0x28] sm:$0xff]
    %v500 = vld [vmem:[#allocation10 + $0x30] sm:$0xff]
    %v501 = vld [vmem:[#allocation10 + $0x38] sm:$0xff]
    %v502 = vld [vmem:[#allocation10 + $0x40] sm:$0xff]
    %v503 = vld [vmem:[#allocation10 + $0x48] sm:$0xff]
    %v504 = vld [vmem:[#allocation10 + $0x50] sm:$0xff]
    %v505 = vld [vmem:[#allocation10 + $0x58] sm:$0xff]
    %v506 = vld [vmem:[#allocation10 + $0x60] sm:$0xff]
    %v507 = vld [vmem:[#allocation10 + $0x68] sm:$0xff]
    %v508 = vld [vmem:[#allocation10 + $0x70] sm:$0xff]
    %v509 = vld [vmem:[#allocation10 + $0x78] sm:$0xff]
    %v510 = vld [vmem:[#allocation10 + $0x80] sm:$0xff]
    %v511 = vld [vmem:[#allocation10 + $0x88] sm:$0xff]
    %v512 = vld [vmem:[#allocation10 + $0x90] sm:$0xff]
    %v513 = vld [vmem:[#allocation10 + $0x98] sm:$0xff]
    %v514 = vld [vmem:[#allocation10 + $0xa0] sm:$0xff]
    %v515 = vld [vmem:[#allocation10 + $0xa8] sm:$0xff]
    %v516 = vld [vmem:[#allocation10 + $0xb0] sm:$0xff]
    %v517 = vld [vmem:[#allocation10 + $0xb8] sm:$0xff]
    %v518 = vld [vmem:[#allocation10 + $0xc0] sm:$0xff]
    %v519 = vld [vmem:[#allocation10 + $0xc8] sm:$0xff]
    %v520 = vld [vmem:[#allocation10 + $0xd0] sm:$0xff]
    %v521 = vld [vmem:[#allocation10 + $0xd8] sm:$0xff]
    %v522 = vld [vmem:[#allocation10 + $0xe0] sm:$0xff]
    %v523 = vld [vmem:[#allocation10 + $0xe8] sm:$0xff]
    %v524 = vld [vmem:[#allocation10 + $0xf0] sm:$0xff]
    %v525 = vld [vmem:[#allocation10 + $0xf8] sm:$0xff]
    %v526 = vld [vmem:[#allocation10 + $0x100] sm:$0xff]
    %v527 = vld [vmem:[#allocation10 + $0x108] sm:$0xff]
    %v528 = vld [vmem:[#allocation10 + $0x110] sm:$0xff]
    %v529 = vld [vmem:[#allocation10 + $0x118] sm:$0xff]
    %v530 = vld [vmem:[#allocation10 + $0x120] sm:$0xff]
    %v531 = vld [vmem:[#allocation10 + $0x128] sm:$0xff]
    %v532 = vld [vmem:[#allocation10 + $0x130] sm:$0xff]
    %v533 = vld [vmem:[#allocation10 + $0x138] sm:$0xff]
    %v534 = vld [vmem:[#allocation10 + $0x140] sm:$0xff]
    %v535 = vld [vmem:[#allocation10 + $0x148] sm:$0xff]
    %v536 = vld [vmem:[#allocation10 + $0x150] sm:$0xff]
    %v537 = vld [vmem:[#allocation10 + $0x158] sm:$0xff]
    %v538 = vld [vmem:[#allocation10 + $0x160] sm:$0xff]
    %v539 = vld [vmem:[#allocation10 + $0x168] sm:$0xff]
    %v540 = vld [vmem:[#allocation10 + $0x170] sm:$0xff]
    %v541 = vld [vmem:[#allocation10 + $0x178] sm:$0xff]
    %v542 = vld [vmem:[#allocation10 + $0x180] sm:$0xff]
    %v543 = vld [vmem:[#allocation10 + $0x188] sm:$0xff]
    %v544 = vld [vmem:[#allocation10 + $0x190] sm:$0xff]
    %v545 = vld [vmem:[#allocation10 + $0x198] sm:$0xff]
    %v546 = vld [vmem:[#allocation10 + $0x1a0] sm:$0xff]
    %v547 = vld [vmem:[#allocation10 + $0x1a8] sm:$0xff]
    %v548 = vld [vmem:[#allocation10 + $0x1b0] sm:$0xff]
    %v549 = vld [vmem:[#allocation10 + $0x1b8] sm:$0xff]
    %v550 = vld [vmem:[#allocation10 + $0x1c0] sm:$0xff]
    %v551 = vld [vmem:[#allocation10 + $0x1c8] sm:$0xff]
    %v552 = vld [vmem:[#allocation10 + $0x1d0] sm:$0xff]
    %v553 = vld [vmem:[#allocation10 + $0x1d8] sm:$0xff]
    %v554 = vld [vmem:[#allocation10 + $0x1e0] sm:$0xff]
    %v555 = vld [vmem:[#allocation10 + $0x1e8] sm:$0xff]
    %v556 = vld [vmem:[#allocation10 + $0x1f0] sm:$0xff]
    %v557 = vld [vmem:[#allocation10 + $0x1f8] sm:$0xff]
    %s558 = smul.u32 0, 8
    %v559 = vld [vmem:[#allocation3] sm:$0xff]
    %v560 = vld [vmem:[#allocation3 + $0x8] sm:$0xff]
    %v561 = vld [vmem:[#allocation4] sm:$0xff]
    %v562 = vld [vmem:[#allocation4 + $0x8] sm:$0xff]
    %v563 = vld [vmem:[#allocation11] sm:$0xff]
    %v564 = vld [vmem:[#allocation11 + $0x8] sm:$0xff]
    %s565 = smul.u32 0, 4
    %s566 = smul.addr %s565, 8
    %s567 = scalar_lea.vmem [#allocation2], %s566
    %v568 = vld [vmem:[%s567] sm:$0xff]
    %v569 = vld [vmem:[%s567 + $0x8] sm:$0xff]
    %v570 = vld [vmem:[%s567 + $0x10] sm:$0xff]
    %v571 = vld [vmem:[%s567 + $0x18] sm:$0xff]
    %v572 = vld [vmem:[%s567 + $0x20] sm:$0xff]
    %v573 = vld [vmem:[%s567 + $0x28] sm:$0xff]
    %v574 = vld [vmem:[%s567 + $0x30] sm:$0xff]
    %v575 = vld [vmem:[%s567 + $0x38] sm:$0xff]
    %576 = vmatpush.msra.mxu0 %v554
    %577 = vmatpush.msra.mxu0 %v550
    %578 = vmatpush.msra.mxu0 %v546
    %579 = vmatpush.msra.mxu0 %v542
    %580 = vmatpush.msra.mxu0 %v538
    %581 = vmatpush.msra.mxu0 %v534
    %582 = vmatpush.msra.mxu0 %v530
    %583 = vmatpush.msra.mxu0 %v526
    %584 = vmatpush.msra.mxu0 %v522
    %585 = vmatpush.msra.mxu0 %v518
    %586 = vmatpush.msra.mxu0 %v514
    %587 = vmatpush.msra.mxu0 %v510
    %588 = vmatpush.msra.mxu0 %v506
    %589 = vmatpush.msra.mxu0 %v502
    %590 = vmatpush.msra.mxu0 %v498
    %591 = vmatpush.msra.mxu0 %v494
    %592 = vmatmul.f32.gmra.mxu0 %v559
    %v593 = vpop.f32.mrf.mxu0
    %v594 = vadd.f32 0.0, %v593
    %595 = vmatmul.f32.gmra.mxu0 %v560
    %v596 = vpop.f32.mrf.mxu0
    %v597 = vadd.f32 0.0, %v596
    %598 = vdwg.mxu0
    %599 = vmatpush.msra.mxu0 %v555
    %600 = vmatpush.msra.mxu0 %v551
    %601 = vmatpush.msra.mxu0 %v547
    %602 = vmatpush.msra.mxu0 %v543
    %603 = vmatpush.msra.mxu0 %v539
    %604 = vmatpush.msra.mxu0 %v535
    %605 = vmatpush.msra.mxu0 %v531
    %606 = vmatpush.msra.mxu0 %v527
    %607 = vmatpush.msra.mxu0 %v523
    %608 = vmatpush.msra.mxu0 %v519
    %609 = vmatpush.msra.mxu0 %v515
    %610 = vmatpush.msra.mxu0 %v511
    %611 = vmatpush.msra.mxu0 %v507
    %612 = vmatpush.msra.mxu0 %v503
    %613 = vmatpush.msra.mxu0 %v499
    %614 = vmatpush.msra.mxu0 %v495
    %615 = vmatmul.f32.gmra.mxu0 %v559
    %v616 = vpop.f32.mrf.mxu0
    %v617 = vadd.f32 0.0, %v616
    %618 = vmatmul.f32.gmra.mxu0 %v560
    %v619 = vpop.f32.mrf.mxu0
    %v620 = vadd.f32 0.0, %v619
    %621 = vdwg.mxu0
    %622 = vmatpush.msra.mxu0 %v556
    %623 = vmatpush.msra.mxu0 %v552
    %624 = vmatpush.msra.mxu0 %v548
    %625 = vmatpush.msra.mxu0 %v544
    %626 = vmatpush.msra.mxu0 %v540
    %627 = vmatpush.msra.mxu0 %v536
    %628 = vmatpush.msra.mxu0 %v532
    %629 = vmatpush.msra.mxu0 %v528
    %630 = vmatpush.msra.mxu0 %v524
    %631 = vmatpush.msra.mxu0 %v520
    %632 = vmatpush.msra.mxu0 %v516
    %633 = vmatpush.msra.mxu0 %v512
    %634 = vmatpush.msra.mxu0 %v508
    %635 = vmatpush.msra.mxu0 %v504
    %636 = vmatpush.msra.mxu0 %v500
    %637 = vmatpush.msra.mxu0 %v496
    %638 = vmatmul.f32.gmra.mxu0 %v559
    %v639 = vpop.f32.mrf.mxu0
    %v640 = vadd.f32 0.0, %v639
    %641 = vmatmul.f32.gmra.mxu0 %v560
    %v642 = vpop.f32.mrf.mxu0
    %v643 = vadd.f32 0.0, %v642
    %644 = vdwg.mxu0
    %645 = vmatpush.msra.mxu0 %v557
    %646 = vmatpush.msra.mxu0 %v553
    %647 = vmatpush.msra.mxu0 %v549
    %648 = vmatpush.msra.mxu0 %v545
    %649 = vmatpush.msra.mxu0 %v541
    %650 = vmatpush.msra.mxu0 %v537
    %651 = vmatpush.msra.mxu0 %v533
    %652 = vmatpush.msra.mxu0 %v529
    %653 = vmatpush.msra.mxu0 %v525
    %654 = vmatpush.msra.mxu0 %v521
    %655 = vmatpush.msra.mxu0 %v517
    %656 = vmatpush.msra.mxu0 %v513
    %657 = vmatpush.msra.mxu0 %v509
    %658 = vmatpush.msra.mxu0 %v505
    %659 = vmatpush.msra.mxu0 %v501
    %660 = vmatpush.msra.mxu0 %v497
    %661 = vmatmul.f32.gmra.mxu0 %v559
    %v662 = vpop.f32.mrf.mxu0
    %v663 = vadd.f32 0.0, %v662
    %664 = vmatmul.f32.gmra.mxu0 %v560
    %v665 = vpop.f32.mrf.mxu0
    %v666 = vadd.f32 0.0, %v665
    %667 = vdwg.mxu0
    %v668 = vadd.f32 %v568, %v594
    %v669 = vadd.f32 %v569, %v617
    %v670 = vadd.f32 %v570, %v640
    %v671 = vadd.f32 %v571, %v663
    %v672 = vadd.f32 %v572, %v597
    %v673 = vadd.f32 %v573, %v620
    %v674 = vadd.f32 %v574, %v643
    %v675 = vadd.f32 %v575, %v666
    %v676 = vmul.f32 %v668, 0.5
    %v677 = vmul.f32 %v672, 0.5
    %v678 = vtanh.pop %v676
    %v679 = vtanh.pop %v677
    %v680 = vadd.f32 %v678, 1.0
    %v681 = vadd.f32 %v679, 1.0
    %v682 = vmul.f32 %v680, 0.5
    %v683 = vmul.f32 %v681, 0.5
    %v684 = vmul.f32 %v669, 0.5
    %v685 = vmul.f32 %v673, 0.5
    %v686 = vtanh.pop %v684
    %v687 = vtanh.pop %v685
    %v688 = vadd.f32 %v686, 1.0
    %v689 = vadd.f32 %v687, 1.0
    %v690 = vmul.f32 %v688, 0.5
    %v691 = vmul.f32 %v689, 0.5
    %v692 = vtanh.pop %v670
    %v693 = vtanh.pop %v674
    %v694 = vmul.f32 %v671, 0.5
    %v695 = vmul.f32 %v675, 0.5
    %v696 = vtanh.pop %v694
    %v697 = vtanh.pop %v695
    %v698 = vadd.f32 %v696, 1.0
    %v699 = vadd.f32 %v697, 1.0
    %v700 = vmul.f32 %v698, 0.5
    %v701 = vmul.f32 %v699, 0.5
    %v702 = vmul.f32 %v690, %v561
    %v703 = vmul.f32 %v691, %v562
    %v704 = vmul.f32 %v682, %v692
    %v705 = vmul.f32 %v683, %v693
    %v706 = vadd.f32 %v702, %v704
    %v707 = vadd.f32 %v703, %v705
    %v708 = vtanh.pop %v706
    %v709 = vtanh.pop %v707
    %v710 = vmul.f32 %v700, %v708
    %v711 = vmul.f32 %v701, %v709
    %s712 = sadd.s32 %s558, 1
    %v713 = vstv %s712
    %vm714 = vcmp.eq.s32.totalorder %v492, %v713
    %vm715 = vcmp.eq.s32.totalorder %v493, %v713
    %v716 = vsel %vm714, 1, 0
    %v717 = vsel %vm715, 1, 0
    %718 = vset.pattern.permute.xlu0 0
    %719 = vperm.xlu0 %718, %v716
    %v720 = vpop.permute.xlu0 %719
    %721 = vset.pattern.permute.xlu0 0
    %722 = vperm.xlu0 %721, %v717
    %v723 = vpop.permute.xlu0 %722
    %vm724 = vcmp.eq.s32.totalorder %v720, 1
    %vm725 = vcmp.eq.s32.totalorder %v723, 1
    %v726 = vsel %vm724, %v710, %v563
    %v727 = vsel %vm725, %v711, %v564
    %s728 = smul.u32 2, 4
    %s729 = smul.addr %s728, 8
    %s730 = scalar_lea.vmem [#allocation2], %s729
    %v731 = vld [vmem:[%s730] sm:$0xff]
    %v732 = vld [vmem:[%s730 + $0x8] sm:$0xff]
    %v733 = vld [vmem:[%s730 + $0x10] sm:$0xff]
    %v734 = vld [vmem:[%s730 + $0x18] sm:$0xff]
    %v735 = vld [vmem:[%s730 + $0x20] sm:$0xff]
    %v736 = vld [vmem:[%s730 + $0x28] sm:$0xff]
    %v737 = vld [vmem:[%s730 + $0x30] sm:$0xff]
    %v738 = vld [vmem:[%s730 + $0x38] sm:$0xff]
    %739 = vmatpush.msra.mxu0 %v554
    %740 = vmatpush.msra.mxu0 %v550
    %741 = vmatpush.msra.mxu0 %v546
    %742 = vmatpush.msra.mxu0 %v542
    %743 = vmatpush.msra.mxu0 %v538
    %744 = vmatpush.msra.mxu0 %v534
    %745 = vmatpush.msra.mxu0 %v530
    %746 = vmatpush.msra.mxu0 %v526
    %747 = vmatpush.msra.mxu0 %v522
    %748 = vmatpush.msra.mxu0 %v518
    %749 = vmatpush.msra.mxu0 %v514
    %750 = vmatpush.msra.mxu0 %v510
    %751 = vmatpush.msra.mxu0 %v506
    %752 = vmatpush.msra.mxu0 %v502
    %753 = vmatpush.msra.mxu0 %v498
    %754 = vmatpush.msra.mxu0 %v494
    %755 = vmatmul.f32.gmra.mxu0 %v710
    %v756 = vpop.f32.mrf.mxu0
    %v757 = vadd.f32 0.0, %v756
    %758 = vmatmul.f32.gmra.mxu0 %v711
    %v759 = vpop.f32.mrf.mxu0
    %v760 = vadd.f32 0.0, %v759
    %761 = vdwg.mxu0
    %762 = vmatpush.msra.mxu0 %v555
    %763 = vmatpush.msra.mxu0 %v551
    %764 = vmatpush.msra.mxu0 %v547
    %765 = vmatpush.msra.mxu0 %v543
    %766 = vmatpush.msra.mxu0 %v539
    %767 = vmatpush.msra.mxu0 %v535
    %768 = vmatpush.msra.mxu0 %v531
    %769 = vmatpush.msra.mxu0 %v527
    %770 = vmatpush.msra.mxu0 %v523
    %771 = vmatpush.msra.mxu0 %v519
    %772 = vmatpush.msra.mxu0 %v515
    %773 = vmatpush.msra.mxu0 %v511
    %774 = vmatpush.msra.mxu0 %v507
    %775 = vmatpush.msra.mxu0 %v503
    %776 = vmatpush.msra.mxu0 %v499
    %777 = vmatpush.msra.mxu0 %v495
    %778 = vmatmul.f32.gmra.mxu0 %v710
    %v779 = vpop.f32.mrf.mxu0
    %v780 = vadd.f32 0.0, %v779
    %781 = vmatmul.f32.gmra.mxu0 %v711
    %v782 = vpop.f32.mrf.mxu0
    %v783 = vadd.f32 0.0, %v782
    %784 = vdwg.mxu0
    %785 = vmatpush.msra.mxu0 %v556
    %786 = vmatpush.msra.mxu0 %v552
    %787 = vmatpush.msra.mxu0 %v548
    %788 = vmatpush.msra.mxu0 %v544
    %789 = vmatpush.msra.mxu0 %v540
    %790 = vmatpush.msra.mxu0 %v536
    %791 = vmatpush.msra.mxu0 %v532
    %792 = vmatpush.msra.mxu0 %v528
    %793 = vmatpush.msra.mxu0 %v524
    %794 = vmatpush.msra.mxu0 %v520
    %795 = vmatpush.msra.mxu0 %v516
    %796 = vmatpush.msra.mxu0 %v512
    %797 = vmatpush.msra.mxu0 %v508
    %798 = vmatpush.msra.mxu0 %v504
    %799 = vmatpush.msra.mxu0 %v500
    %800 = vmatpush.msra.mxu0 %v496
    %801 = vmatmul.f32.gmra.mxu0 %v710
    %v802 = vpop.f32.mrf.mxu0
    %v803 = vadd.f32 0.0, %v802
    %804 = vmatmul.f32.gmra.mxu0 %v711
    %v805 = vpop.f32.mrf.mxu0
    %v806 = vadd.f32 0.0, %v805
    %807 = vdwg.mxu0
    %808 = vmatpush.msra.mxu0 %v557
    %809 = vmatpush.msra.mxu0 %v553
    %810 = vmatpush.msra.mxu0 %v549
    %811 = vmatpush.msra.mxu0 %v545
    %812 = vmatpush.msra.mxu0 %v541
    %813 = vmatpush.msra.mxu0 %v537
    %814 = vmatpush.msra.mxu0 %v533
    %815 = vmatpush.msra.mxu0 %v529
    %816 = vmatpush.msra.mxu0 %v525
    %817 = vmatpush.msra.mxu0 %v521
    %818 = vmatpush.msra.mxu0 %v517
    %819 = vmatpush.msra.mxu0 %v513
    %820 = vmatpush.msra.mxu0 %v509
    %821 = vmatpush.msra.mxu0 %v505
    %822 = vmatpush.msra.mxu0 %v501
    %823 = vmatpush.msra.mxu0 %v497
    %824 = vmatmul.f32.gmra.mxu0 %v710
    %v825 = vpop.f32.mrf.mxu0
    %v826 = vadd.f32 0.0, %v825
    %827 = vmatmul.f32.gmra.mxu0 %v711
    %v828 = vpop.f32.mrf.mxu0
    %v829 = vadd.f32 0.0, %v828
    %830 = vdwg.mxu0
    %v831 = vadd.f32 %v731, %v757
    %v832 = vadd.f32 %v732, %v780
    %v833 = vadd.f32 %v733, %v803
    %v834 = vadd.f32 %v734, %v826
    %v835 = vadd.f32 %v735, %v760
    %v836 = vadd.f32 %v736, %v783
    %v837 = vadd.f32 %v737, %v806
    %v838 = vadd.f32 %v738, %v829
    %v839 = vmul.f32 %v831, 0.5
    %v840 = vmul.f32 %v835, 0.5
    %v841 = vtanh.pop %v839
    %v842 = vtanh.pop %v840
    %v843 = vadd.f32 %v841, 1.0
    %v844 = vadd.f32 %v842, 1.0
    %v845 = vmul.f32 %v843, 0.5
    %v846 = vmul.f32 %v844, 0.5
    %v847 = vmul.f32 %v832, 0.5
    %v848 = vmul.f32 %v836, 0.5
    %v849 = vtanh.pop %v847
    %v850 = vtanh.pop %v848
    %v851 = vadd.f32 %v849, 1.0
    %v852 = vadd.f32 %v850, 1.0
    %v853 = vmul.f32 %v851, 0.5
    %v854 = vmul.f32 %v852, 0.5
    %v855 = vtanh.pop %v833
    %v856 = vtanh.pop %v837
    %v857 = vmul.f32 %v834, 0.5
    %v858 = vmul.f32 %v838, 0.5
    %v859 = vtanh.pop %v857
    %v860 = vtanh.pop %v858
    %v861 = vadd.f32 %v859, 1.0
    %v862 = vadd.f32 %v860, 1.0
    %v863 = vmul.f32 %v861, 0.5
    %v864 = vmul.f32 %v862, 0.5
    %v865 = vmul.f32 %v853, %v706
    %v866 = vmul.f32 %v854, %v707
    %v867 = vmul.f32 %v845, %v855
    %v868 = vmul.f32 %v846, %v856
    %v869 = vadd.f32 %v865, %v867
    %v870 = vadd.f32 %v866, %v868
    %v871 = vtanh.pop %v869
    %v872 = vtanh.pop %v870
    %v873 = vmul.f32 %v863, %v871
    %v874 = vmul.f32 %v864, %v872
    %s875 = sadd.s32 %s558, 2
    %v876 = vstv %s875
    %vm877 = vcmp.eq.s32.totalorder %v492, %v876
    %vm878 = vcmp.eq.s32.totalorder %v493, %v876
    %v879 = vsel %vm877, 1, 0
    %v880 = vsel %vm878, 1, 0
    %881 = vset.pattern.permute.xlu0 0
    %882 = vperm.xlu0 %881, %v879
    %v883 = vpop.permute.xlu0 %882
    %884 = vset.pattern.permute.xlu0 0
    %885 = vperm.xlu0 %884, %v880
    %v886 = vpop.permute.xlu0 %885
    %vm887 = vcmp.eq.s32.totalorder %v883, 1
    %vm888 = vcmp.eq.s32.totalorder %v886, 1
    %v889 = vsel %vm887, %v873, %v726
    %v890 = vsel %vm888, %v874, %v727
    %s891 = smul.u32 4, 4
    %s892 = smul.addr %s891, 8
    %s893 = scalar_lea.vmem [#allocation2], %s892
    %v894 = vld [vmem:[%s893] sm:$0xff]
    %v895 = vld [vmem:[%s893 + $0x8] sm:$0xff]
    %v896 = vld [vmem:[%s893 + $0x10] sm:$0xff]
    %v897 = vld [vmem:[%s893 + $0x18] sm:$0xff]
    %v898 = vld [vmem:[%s893 + $0x20] sm:$0xff]
    %v899 = vld [vmem:[%s893 + $0x28] sm:$0xff]
    %v900 = vld [vmem:[%s893 + $0x30] sm:$0xff]
    %v901 = vld [vmem:[%s893 + $0x38] sm:$0xff]
    %902 = vmatpush.msra.mxu0 %v554
    %903 = vmatpush.msra.mxu0 %v550
    %904 = vmatpush.msra.mxu0 %v546
    %905 = vmatpush.msra.mxu0 %v542
    %906 = vmatpush.msra.mxu0 %v538
    %907 = vmatpush.msra.mxu0 %v534
    %908 = vmatpush.msra.mxu0 %v530
    %909 = vmatpush.msra.mxu0 %v526
    %910 = vmatpush.msra.mxu0 %v522
    %911 = vmatpush.msra.mxu0 %v518
    %912 = vmatpush.msra.mxu0 %v514
    %913 = vmatpush.msra.mxu0 %v510
    %914 = vmatpush.msra.mxu0 %v506
    %915 = vmatpush.msra.mxu0 %v502
    %916 = vmatpush.msra.mxu0 %v498
    %917 = vmatpush.msra.mxu0 %v494
    %918 = vmatmul.f32.gmra.mxu0 %v873
    %v919 = vpop.f32.mrf.mxu0
    %v920 = vadd.f32 0.0, %v919
    %921 = vmatmul.f32.gmra.mxu0 %v874
    %v922 = vpop.f32.mrf.mxu0
    %v923 = vadd.f32 0.0, %v922
    %924 = vdwg.mxu0
    %925 = vmatpush.msra.mxu0 %v555
    %926 = vmatpush.msra.mxu0 %v551
    %927 = vmatpush.msra.mxu0 %v547
    %928 = vmatpush.msra.mxu0 %v543
    %929 = vmatpush.msra.mxu0 %v539
    %930 = vmatpush.msra.mxu0 %v535
    %931 = vmatpush.msra.mxu0 %v531
    %932 = vmatpush.msra.mxu0 %v527
    %933 = vmatpush.msra.mxu0 %v523
    %934 = vmatpush.msra.mxu0 %v519
    %935 = vmatpush.msra.mxu0 %v515
    %936 = vmatpush.msra.mxu0 %v511
    %937 = vmatpush.msra.mxu0 %v507
    %938 = vmatpush.msra.mxu0 %v503
    %939 = vmatpush.msra.mxu0 %v499
    %940 = vmatpush.msra.mxu0 %v495
    %941 = vmatmul.f32.gmra.mxu0 %v873
    %v942 = vpop.f32.mrf.mxu0
    %v943 = vadd.f32 0.0, %v942
    %944 = vmatmul.f32.gmra.mxu0 %v874
    %v945 = vpop.f32.mrf.mxu0
    %v946 = vadd.f32 0.0, %v945
    %947 = vdwg.mxu0
    %948 = vmatpush.msra.mxu0 %v556
    %949 = vmatpush.msra.mxu0 %v552
    %950 = vmatpush.msra.mxu0 %v548
    %951 = vmatpush.msra.mxu0 %v544
    %952 = vmatpush.msra.mxu0 %v540
    %953 = vmatpush.msra.mxu0 %v536
    %954 = vmatpush.msra.mxu0 %v532
    %955 = vmatpush.msra.mxu0 %v528
    %956 = vmatpush.msra.mxu0 %v524
    %957 = vmatpush.msra.mxu0 %v520
    %958 = vmatpush.msra.mxu0 %v516
    %959 = vmatpush.msra.mxu0 %v512
    %960 = vmatpush.msra.mxu0 %v508
    %961 = vmatpush.msra.mxu0 %v504
    %962 = vmatpush.msra.mxu0 %v500
    %963 = vmatpush.msra.mxu0 %v496
    %964 = vmatmul.f32.gmra.mxu0 %v873
    %v965 = vpop.f32.mrf.mxu0
    %v966 = vadd.f32 0.0, %v965
    %967 = vmatmul.f32.gmra.mxu0 %v874
    %v968 = vpop.f32.mrf.mxu0
    %v969 = vadd.f32 0.0, %v968
    %970 = vdwg.mxu0
    %971 = vmatpush.msra.mxu0 %v557
    %972 = vmatpush.msra.mxu0 %v553
    %973 = vmatpush.msra.mxu0 %v549
    %974 = vmatpush.msra.mxu0 %v545
    %975 = vmatpush.msra.mxu0 %v541
    %976 = vmatpush.msra.mxu0 %v537
    %977 = vmatpush.msra.mxu0 %v533
    %978 = vmatpush.msra.mxu0 %v529
    %979 = vmatpush.msra.mxu0 %v525
    %980 = vmatpush.msra.mxu0 %v521
    %981 = vmatpush.msra.mxu0 %v517
    %982 = vmatpush.msra.mxu0 %v513
    %983 = vmatpush.msra.mxu0 %v509
    %984 = vmatpush.msra.mxu0 %v505
    %985 = vmatpush.msra.mxu0 %v501
    %986 = vmatpush.msra.mxu0 %v497
    %987 = vmatmul.f32.gmra.mxu0 %v873
    %v988 = vpop.f32.mrf.mxu0
    %v989 = vadd.f32 0.0, %v988
    %990 = vmatmul.f32.gmra.mxu0 %v874
    %v991 = vpop.f32.mrf.mxu0
    %v992 = vadd.f32 0.0, %v991
    %993 = vdwg.mxu0
    %v994 = vadd.f32 %v894, %v920
    %v995 = vadd.f32 %v895, %v943
    %v996 = vadd.f32 %v896, %v966
    %v997 = vadd.f32 %v897, %v989
    %v998 = vadd.f32 %v898, %v923
    %v999 = vadd.f32 %v899, %v946
    %v1000 = vadd.f32 %v900, %v969
    %v1001 = vadd.f32 %v901, %v992
    %v1002 = vmul.f32 %v994, 0.5
    %v1003 = vmul.f32 %v998, 0.5
    %v1004 = vtanh.pop %v1002
    %v1005 = vtanh.pop %v1003
    %v1006 = vadd.f32 %v1004, 1.0
    %v1007 = vadd.f32 %v1005, 1.0
    %v1008 = vmul.f32 %v1006, 0.5
    %v1009 = vmul.f32 %v1007, 0.5
    %v1010 = vmul.f32 %v995, 0.5
    %v1011 = vmul.f32 %v999, 0.5
    %v1012 = vtanh.pop %v1010
    %v1013 = vtanh.pop %v1011
    %v1014 = vadd.f32 %v1012, 1.0
    %v1015 = vadd.f32 %v1013, 1.0
    %v1016 = vmul.f32 %v1014, 0.5
    %v1017 = vmul.f32 %v1015, 0.5
    %v1018 = vtanh.pop %v996
    %v1019 = vtanh.pop %v1000
    %v1020 = vmul.f32 %v997, 0.5
    %v1021 = vmul.f32 %v1001, 0.5
    %v1022 = vtanh.pop %v1020
    %v1023 = vtanh.pop %v1021
    %v1024 = vadd.f32 %v1022, 1.0
    %v1025 = vadd.f32 %v1023, 1.0
    %v1026 = vmul.f32 %v1024, 0.5
    %v1027 = vmul.f32 %v1025, 0.5
    %v1028 = vmul.f32 %v1016, %v869
    %v1029 = vmul.f32 %v1017, %v870
    %v1030 = vmul.f32 %v1008, %v1018
    %v1031 = vmul.f32 %v1009, %v1019
    %v1032 = vadd.f32 %v1028, %v1030
    %v1033 = vadd.f32 %v1029, %v1031
    %v1034 = vtanh.pop %v1032
    %v1035 = vtanh.pop %v1033
    %v1036 = vmul.f32 %v1026, %v1034
    %v1037 = vmul.f32 %v1027, %v1035
    %s1038 = sadd.s32 %s558, 3
    %v1039 = vstv %s1038
    %vm1040 = vcmp.eq.s32.totalorder %v492, %v1039
    %vm1041 = vcmp.eq.s32.totalorder %v493, %v1039
    %v1042 = vsel %vm1040, 1, 0
    %v1043 = vsel %vm1041, 1, 0
    %1044 = vset.pattern.permute.xlu0 0
    %1045 = vperm.xlu0 %1044, %v1042
    %v1046 = vpop.permute.xlu0 %1045
    %1047 = vset.pattern.permute.xlu0 0
    %1048 = vperm.xlu0 %1047, %v1043
    %v1049 = vpop.permute.xlu0 %1048
    %vm1050 = vcmp.eq.s32.totalorder %v1046, 1
    %vm1051 = vcmp.eq.s32.totalorder %v1049, 1
    %v1052 = vsel %vm1050, %v1036, %v889
    %v1053 = vsel %vm1051, %v1037, %v890
    %s1054 = smul.u32 6, 4
    %s1055 = smul.addr %s1054, 8
    %s1056 = scalar_lea.vmem [#allocation2], %s1055
    %v1057 = vld [vmem:[%s1056] sm:$0xff]
    %v1058 = vld [vmem:[%s1056 + $0x8] sm:$0xff]
    %v1059 = vld [vmem:[%s1056 + $0x10] sm:$0xff]
    %v1060 = vld [vmem:[%s1056 + $0x18] sm:$0xff]
    %v1061 = vld [vmem:[%s1056 + $0x20] sm:$0xff]
    %v1062 = vld [vmem:[%s1056 + $0x28] sm:$0xff]
    %v1063 = vld [vmem:[%s1056 + $0x30] sm:$0xff]
    %v1064 = vld [vmem:[%s1056 + $0x38] sm:$0xff]
    %1065 = vmatpush.msra.mxu0 %v554
    %1066 = vmatpush.msra.mxu0 %v550
    %1067 = vmatpush.msra.mxu0 %v546
    %1068 = vmatpush.msra.mxu0 %v542
    %1069 = vmatpush.msra.mxu0 %v538
    %1070 = vmatpush.msra.mxu0 %v534
    %1071 = vmatpush.msra.mxu0 %v530
    %1072 = vmatpush.msra.mxu0 %v526
    %1073 = vmatpush.msra.mxu0 %v522
    %1074 = vmatpush.msra.mxu0 %v518
    %1075 = vmatpush.msra.mxu0 %v514
    %1076 = vmatpush.msra.mxu0 %v510
    %1077 = vmatpush.msra.mxu0 %v506
    %1078 = vmatpush.msra.mxu0 %v502
    %1079 = vmatpush.msra.mxu0 %v498
    %1080 = vmatpush.msra.mxu0 %v494
    %1081 = vmatmul.f32.gmra.mxu0 %v1036
    %v1082 = vpop.f32.mrf.mxu0
    %v1083 = vadd.f32 0.0, %v1082
    %1084 = vmatmul.f32.gmra.mxu0 %v1037
    %v1085 = vpop.f32.mrf.mxu0
    %v1086 = vadd.f32 0.0, %v1085
    %1087 = vdwg.mxu0
    %1088 = vmatpush.msra.mxu0 %v555
    %1089 = vmatpush.msra.mxu0 %v551
    %1090 = vmatpush.msra.mxu0 %v547
    %1091 = vmatpush.msra.mxu0 %v543
    %1092 = vmatpush.msra.mxu0 %v539
    %1093 = vmatpush.msra.mxu0 %v535
    %1094 = vmatpush.msra.mxu0 %v531
    %1095 = vmatpush.msra.mxu0 %v527
    %1096 = vmatpush.msra.mxu0 %v523
    %1097 = vmatpush.msra.mxu0 %v519
    %1098 = vmatpush.msra.mxu0 %v515
    %1099 = vmatpush.msra.mxu0 %v511
    %1100 = vmatpush.msra.mxu0 %v507
    %1101 = vmatpush.msra.mxu0 %v503
    %1102 = vmatpush.msra.mxu0 %v499
    %1103 = vmatpush.msra.mxu0 %v495
    %1104 = vmatmul.f32.gmra.mxu0 %v1036
    %v1105 = vpop.f32.mrf.mxu0
    %v1106 = vadd.f32 0.0, %v1105
    %1107 = vmatmul.f32.gmra.mxu0 %v1037
    %v1108 = vpop.f32.mrf.mxu0
    %v1109 = vadd.f32 0.0, %v1108
    %1110 = vdwg.mxu0
    %1111 = vmatpush.msra.mxu0 %v556
    %1112 = vmatpush.msra.mxu0 %v552
    %1113 = vmatpush.msra.mxu0 %v548
    %1114 = vmatpush.msra.mxu0 %v544
    %1115 = vmatpush.msra.mxu0 %v540
    %1116 = vmatpush.msra.mxu0 %v536
    %1117 = vmatpush.msra.mxu0 %v532
    %1118 = vmatpush.msra.mxu0 %v528
    %1119 = vmatpush.msra.mxu0 %v524
    %1120 = vmatpush.msra.mxu0 %v520
    %1121 = vmatpush.msra.mxu0 %v516
    %1122 = vmatpush.msra.mxu0 %v512
    %1123 = vmatpush.msra.mxu0 %v508
    %1124 = vmatpush.msra.mxu0 %v504
    %1125 = vmatpush.msra.mxu0 %v500
    %1126 = vmatpush.msra.mxu0 %v496
    %1127 = vmatmul.f32.gmra.mxu0 %v1036
    %v1128 = vpop.f32.mrf.mxu0
    %v1129 = vadd.f32 0.0, %v1128
    %1130 = vmatmul.f32.gmra.mxu0 %v1037
    %v1131 = vpop.f32.mrf.mxu0
    %v1132 = vadd.f32 0.0, %v1131
    %1133 = vdwg.mxu0
    %1134 = vmatpush.msra.mxu0 %v557
    %1135 = vmatpush.msra.mxu0 %v553
    %1136 = vmatpush.msra.mxu0 %v549
    %1137 = vmatpush.msra.mxu0 %v545
    %1138 = vmatpush.msra.mxu0 %v541
    %1139 = vmatpush.msra.mxu0 %v537
    %1140 = vmatpush.msra.mxu0 %v533
    %1141 = vmatpush.msra.mxu0 %v529
    %1142 = vmatpush.msra.mxu0 %v525
    %1143 = vmatpush.msra.mxu0 %v521
    %1144 = vmatpush.msra.mxu0 %v517
    %1145 = vmatpush.msra.mxu0 %v513
    %1146 = vmatpush.msra.mxu0 %v509
    %1147 = vmatpush.msra.mxu0 %v505
    %1148 = vmatpush.msra.mxu0 %v501
    %1149 = vmatpush.msra.mxu0 %v497
    %1150 = vmatmul.f32.gmra.mxu0 %v1036
    %v1151 = vpop.f32.mrf.mxu0
    %v1152 = vadd.f32 0.0, %v1151
    %1153 = vmatmul.f32.gmra.mxu0 %v1037
    %v1154 = vpop.f32.mrf.mxu0
    %v1155 = vadd.f32 0.0, %v1154
    %1156 = vdwg.mxu0
    %v1157 = vadd.f32 %v1057, %v1083
    %v1158 = vadd.f32 %v1058, %v1106
    %v1159 = vadd.f32 %v1059, %v1129
    %v1160 = vadd.f32 %v1060, %v1152
    %v1161 = vadd.f32 %v1061, %v1086
    %v1162 = vadd.f32 %v1062, %v1109
    %v1163 = vadd.f32 %v1063, %v1132
    %v1164 = vadd.f32 %v1064, %v1155
    %v1165 = vmul.f32 %v1157, 0.5
    %v1166 = vmul.f32 %v1161, 0.5
    %v1167 = vtanh.pop %v1165
    %v1168 = vtanh.pop %v1166
    %v1169 = vadd.f32 %v1167, 1.0
    %v1170 = vadd.f32 %v1168, 1.0
    %v1171 = vmul.f32 %v1169, 0.5
    %v1172 = vmul.f32 %v1170, 0.5
    %v1173 = vmul.f32 %v1158, 0.5
    %v1174 = vmul.f32 %v1162, 0.5
    %v1175 = vtanh.pop %v1173
    %v1176 = vtanh.pop %v1174
    %v1177 = vadd.f32 %v1175, 1.0
    %v1178 = vadd.f32 %v1176, 1.0
    %v1179 = vmul.f32 %v1177, 0.5
    %v1180 = vmul.f32 %v1178, 0.5
    %v1181 = vtanh.pop %v1159
    %v1182 = vtanh.pop %v1163
    %v1183 = vmul.f32 %v1160, 0.5
    %v1184 = vmul.f32 %v1164, 0.5
    %v1185 = vtanh.pop %v1183
    %v1186 = vtanh.pop %v1184
    %v1187 = vadd.f32 %v1185, 1.0
    %v1188 = vadd.f32 %v1186, 1.0
    %v1189 = vmul.f32 %v1187, 0.5
    %v1190 = vmul.f32 %v1188, 0.5
    %v1191 = vmul.f32 %v1179, %v1032
    %v1192 = vmul.f32 %v1180, %v1033
    %v1193 = vmul.f32 %v1171, %v1181
    %v1194 = vmul.f32 %v1172, %v1182
    %v1195 = vadd.f32 %v1191, %v1193
    %v1196 = vadd.f32 %v1192, %v1194
    %v1197 = vtanh.pop %v1195
    %v1198 = vtanh.pop %v1196
    %v1199 = vmul.f32 %v1189, %v1197
    %v1200 = vmul.f32 %v1190, %v1198
    %s1201 = sadd.s32 %s558, 4
    %v1202 = vstv %s1201
    %vm1203 = vcmp.eq.s32.totalorder %v492, %v1202
    %vm1204 = vcmp.eq.s32.totalorder %v493, %v1202
    %v1205 = vsel %vm1203, 1, 0
    %v1206 = vsel %vm1204, 1, 0
    %1207 = vset.pattern.permute.xlu0 0
    %1208 = vperm.xlu0 %1207, %v1205
    %v1209 = vpop.permute.xlu0 %1208
    %1210 = vset.pattern.permute.xlu0 0
    %1211 = vperm.xlu0 %1210, %v1206
    %v1212 = vpop.permute.xlu0 %1211
    %vm1213 = vcmp.eq.s32.totalorder %v1209, 1
    %vm1214 = vcmp.eq.s32.totalorder %v1212, 1
    %v1215 = vsel %vm1213, %v1199, %v1052
    %v1216 = vsel %vm1214, %v1200, %v1053
    %s1217 = smul.u32 8, 4
    %s1218 = smul.addr %s1217, 8
    %s1219 = scalar_lea.vmem [#allocation2], %s1218
    %v1220 = vld [vmem:[%s1219] sm:$0xff]
    %v1221 = vld [vmem:[%s1219 + $0x8] sm:$0xff]
    %v1222 = vld [vmem:[%s1219 + $0x10] sm:$0xff]
    %v1223 = vld [vmem:[%s1219 + $0x18] sm:$0xff]
    %v1224 = vld [vmem:[%s1219 + $0x20] sm:$0xff]
    %v1225 = vld [vmem:[%s1219 + $0x28] sm:$0xff]
    %v1226 = vld [vmem:[%s1219 + $0x30] sm:$0xff]
    %v1227 = vld [vmem:[%s1219 + $0x38] sm:$0xff]
    %1228 = vmatpush.msra.mxu0 %v554
    %1229 = vmatpush.msra.mxu0 %v550
    %1230 = vmatpush.msra.mxu0 %v546
    %1231 = vmatpush.msra.mxu0 %v542
    %1232 = vmatpush.msra.mxu0 %v538
    %1233 = vmatpush.msra.mxu0 %v534
    %1234 = vmatpush.msra.mxu0 %v530
    %1235 = vmatpush.msra.mxu0 %v526
    %1236 = vmatpush.msra.mxu0 %v522
    %1237 = vmatpush.msra.mxu0 %v518
    %1238 = vmatpush.msra.mxu0 %v514
    %1239 = vmatpush.msra.mxu0 %v510
    %1240 = vmatpush.msra.mxu0 %v506
    %1241 = vmatpush.msra.mxu0 %v502
    %1242 = vmatpush.msra.mxu0 %v498
    %1243 = vmatpush.msra.mxu0 %v494
    %1244 = vmatmul.f32.gmra.mxu0 %v1199
    %v1245 = vpop.f32.mrf.mxu0
    %v1246 = vadd.f32 0.0, %v1245
    %1247 = vmatmul.f32.gmra.mxu0 %v1200
    %v1248 = vpop.f32.mrf.mxu0
    %v1249 = vadd.f32 0.0, %v1248
    %1250 = vdwg.mxu0
    %1251 = vmatpush.msra.mxu0 %v555
    %1252 = vmatpush.msra.mxu0 %v551
    %1253 = vmatpush.msra.mxu0 %v547
    %1254 = vmatpush.msra.mxu0 %v543
    %1255 = vmatpush.msra.mxu0 %v539
    %1256 = vmatpush.msra.mxu0 %v535
    %1257 = vmatpush.msra.mxu0 %v531
    %1258 = vmatpush.msra.mxu0 %v527
    %1259 = vmatpush.msra.mxu0 %v523
    %1260 = vmatpush.msra.mxu0 %v519
    %1261 = vmatpush.msra.mxu0 %v515
    %1262 = vmatpush.msra.mxu0 %v511
    %1263 = vmatpush.msra.mxu0 %v507
    %1264 = vmatpush.msra.mxu0 %v503
    %1265 = vmatpush.msra.mxu0 %v499
    %1266 = vmatpush.msra.mxu0 %v495
    %1267 = vmatmul.f32.gmra.mxu0 %v1199
    %v1268 = vpop.f32.mrf.mxu0
    %v1269 = vadd.f32 0.0, %v1268
    %1270 = vmatmul.f32.gmra.mxu0 %v1200
    %v1271 = vpop.f32.mrf.mxu0
    %v1272 = vadd.f32 0.0, %v1271
    %1273 = vdwg.mxu0
    %1274 = vmatpush.msra.mxu0 %v556
    %1275 = vmatpush.msra.mxu0 %v552
    %1276 = vmatpush.msra.mxu0 %v548
    %1277 = vmatpush.msra.mxu0 %v544
    %1278 = vmatpush.msra.mxu0 %v540
    %1279 = vmatpush.msra.mxu0 %v536
    %1280 = vmatpush.msra.mxu0 %v532
    %1281 = vmatpush.msra.mxu0 %v528
    %1282 = vmatpush.msra.mxu0 %v524
    %1283 = vmatpush.msra.mxu0 %v520
    %1284 = vmatpush.msra.mxu0 %v516
    %1285 = vmatpush.msra.mxu0 %v512
    %1286 = vmatpush.msra.mxu0 %v508
    %1287 = vmatpush.msra.mxu0 %v504
    %1288 = vmatpush.msra.mxu0 %v500
    %1289 = vmatpush.msra.mxu0 %v496
    %1290 = vmatmul.f32.gmra.mxu0 %v1199
    %v1291 = vpop.f32.mrf.mxu0
    %v1292 = vadd.f32 0.0, %v1291
    %1293 = vmatmul.f32.gmra.mxu0 %v1200
    %v1294 = vpop.f32.mrf.mxu0
    %v1295 = vadd.f32 0.0, %v1294
    %1296 = vdwg.mxu0
    %1297 = vmatpush.msra.mxu0 %v557
    %1298 = vmatpush.msra.mxu0 %v553
    %1299 = vmatpush.msra.mxu0 %v549
    %1300 = vmatpush.msra.mxu0 %v545
    %1301 = vmatpush.msra.mxu0 %v541
    %1302 = vmatpush.msra.mxu0 %v537
    %1303 = vmatpush.msra.mxu0 %v533
    %1304 = vmatpush.msra.mxu0 %v529
    %1305 = vmatpush.msra.mxu0 %v525
    %1306 = vmatpush.msra.mxu0 %v521
    %1307 = vmatpush.msra.mxu0 %v517
    %1308 = vmatpush.msra.mxu0 %v513
    %1309 = vmatpush.msra.mxu0 %v509
    %1310 = vmatpush.msra.mxu0 %v505
    %1311 = vmatpush.msra.mxu0 %v501
    %1312 = vmatpush.msra.mxu0 %v497
    %1313 = vmatmul.f32.gmra.mxu0 %v1199
    %v1314 = vpop.f32.mrf.mxu0
    %v1315 = vadd.f32 0.0, %v1314
    %1316 = vmatmul.f32.gmra.mxu0 %v1200
    %v1317 = vpop.f32.mrf.mxu0
    %v1318 = vadd.f32 0.0, %v1317
    %1319 = vdwg.mxu0
    %v1320 = vadd.f32 %v1220, %v1246
    %v1321 = vadd.f32 %v1221, %v1269
    %v1322 = vadd.f32 %v1222, %v1292
    %v1323 = vadd.f32 %v1223, %v1315
    %v1324 = vadd.f32 %v1224, %v1249
    %v1325 = vadd.f32 %v1225, %v1272
    %v1326 = vadd.f32 %v1226, %v1295
    %v1327 = vadd.f32 %v1227, %v1318
    %v1328 = vmul.f32 %v1320, 0.5
    %v1329 = vmul.f32 %v1324, 0.5
    %v1330 = vtanh.pop %v1328
    %v1331 = vtanh.pop %v1329
    %v1332 = vadd.f32 %v1330, 1.0
    %v1333 = vadd.f32 %v1331, 1.0
    %v1334 = vmul.f32 %v1332, 0.5
    %v1335 = vmul.f32 %v1333, 0.5
    %v1336 = vmul.f32 %v1321, 0.5
    %v1337 = vmul.f32 %v1325, 0.5
    %v1338 = vtanh.pop %v1336
    %v1339 = vtanh.pop %v1337
    %v1340 = vadd.f32 %v1338, 1.0
    %v1341 = vadd.f32 %v1339, 1.0
    %v1342 = vmul.f32 %v1340, 0.5
    %v1343 = vmul.f32 %v1341, 0.5
    %v1344 = vtanh.pop %v1322
    %v1345 = vtanh.pop %v1326
    %v1346 = vmul.f32 %v1323, 0.5
    %v1347 = vmul.f32 %v1327, 0.5
    %v1348 = vtanh.pop %v1346
    %v1349 = vtanh.pop %v1347
    %v1350 = vadd.f32 %v1348, 1.0
    %v1351 = vadd.f32 %v1349, 1.0
    %v1352 = vmul.f32 %v1350, 0.5
    %v1353 = vmul.f32 %v1351, 0.5
    %v1354 = vmul.f32 %v1342, %v1195
    %v1355 = vmul.f32 %v1343, %v1196
    %v1356 = vmul.f32 %v1334, %v1344
    %v1357 = vmul.f32 %v1335, %v1345
    %v1358 = vadd.f32 %v1354, %v1356
    %v1359 = vadd.f32 %v1355, %v1357
    %v1360 = vtanh.pop %v1358
    %v1361 = vtanh.pop %v1359
    %v1362 = vmul.f32 %v1352, %v1360
    %v1363 = vmul.f32 %v1353, %v1361
    %s1364 = sadd.s32 %s558, 5
    %v1365 = vstv %s1364
    %vm1366 = vcmp.eq.s32.totalorder %v492, %v1365
    %vm1367 = vcmp.eq.s32.totalorder %v493, %v1365
    %v1368 = vsel %vm1366, 1, 0
    %v1369 = vsel %vm1367, 1, 0
    %1370 = vset.pattern.permute.xlu0 0
    %1371 = vperm.xlu0 %1370, %v1368
    %v1372 = vpop.permute.xlu0 %1371
    %1373 = vset.pattern.permute.xlu0 0
    %1374 = vperm.xlu0 %1373, %v1369
    %v1375 = vpop.permute.xlu0 %1374
    %vm1376 = vcmp.eq.s32.totalorder %v1372, 1
    %vm1377 = vcmp.eq.s32.totalorder %v1375, 1
    %v1378 = vsel %vm1376, %v1362, %v1215
    %v1379 = vsel %vm1377, %v1363, %v1216
    %s1380 = smul.u32 10, 4
    %s1381 = smul.addr %s1380, 8
    %s1382 = scalar_lea.vmem [#allocation2], %s1381
    %v1383 = vld [vmem:[%s1382] sm:$0xff]
    %v1384 = vld [vmem:[%s1382 + $0x8] sm:$0xff]
    %v1385 = vld [vmem:[%s1382 + $0x10] sm:$0xff]
    %v1386 = vld [vmem:[%s1382 + $0x18] sm:$0xff]
    %v1387 = vld [vmem:[%s1382 + $0x20] sm:$0xff]
    %v1388 = vld [vmem:[%s1382 + $0x28] sm:$0xff]
    %v1389 = vld [vmem:[%s1382 + $0x30] sm:$0xff]
    %v1390 = vld [vmem:[%s1382 + $0x38] sm:$0xff]
    %1391 = vmatpush.msra.mxu0 %v554
    %1392 = vmatpush.msra.mxu0 %v550
    %1393 = vmatpush.msra.mxu0 %v546
    %1394 = vmatpush.msra.mxu0 %v542
    %1395 = vmatpush.msra.mxu0 %v538
    %1396 = vmatpush.msra.mxu0 %v534
    %1397 = vmatpush.msra.mxu0 %v530
    %1398 = vmatpush.msra.mxu0 %v526
    %1399 = vmatpush.msra.mxu0 %v522
    %1400 = vmatpush.msra.mxu0 %v518
    %1401 = vmatpush.msra.mxu0 %v514
    %1402 = vmatpush.msra.mxu0 %v510
    %1403 = vmatpush.msra.mxu0 %v506
    %1404 = vmatpush.msra.mxu0 %v502
    %1405 = vmatpush.msra.mxu0 %v498
    %1406 = vmatpush.msra.mxu0 %v494
    %1407 = vmatmul.f32.gmra.mxu0 %v1362
    %v1408 = vpop.f32.mrf.mxu0
    %v1409 = vadd.f32 0.0, %v1408
    %1410 = vmatmul.f32.gmra.mxu0 %v1363
    %v1411 = vpop.f32.mrf.mxu0
    %v1412 = vadd.f32 0.0, %v1411
    %1413 = vdwg.mxu0
    %1414 = vmatpush.msra.mxu0 %v555
    %1415 = vmatpush.msra.mxu0 %v551
    %1416 = vmatpush.msra.mxu0 %v547
    %1417 = vmatpush.msra.mxu0 %v543
    %1418 = vmatpush.msra.mxu0 %v539
    %1419 = vmatpush.msra.mxu0 %v535
    %1420 = vmatpush.msra.mxu0 %v531
    %1421 = vmatpush.msra.mxu0 %v527
    %1422 = vmatpush.msra.mxu0 %v523
    %1423 = vmatpush.msra.mxu0 %v519
    %1424 = vmatpush.msra.mxu0 %v515
    %1425 = vmatpush.msra.mxu0 %v511
    %1426 = vmatpush.msra.mxu0 %v507
    %1427 = vmatpush.msra.mxu0 %v503
    %1428 = vmatpush.msra.mxu0 %v499
    %1429 = vmatpush.msra.mxu0 %v495
    %1430 = vmatmul.f32.gmra.mxu0 %v1362
    %v1431 = vpop.f32.mrf.mxu0
    %v1432 = vadd.f32 0.0, %v1431
    %1433 = vmatmul.f32.gmra.mxu0 %v1363
    %v1434 = vpop.f32.mrf.mxu0
    %v1435 = vadd.f32 0.0, %v1434
    %1436 = vdwg.mxu0
    %1437 = vmatpush.msra.mxu0 %v556
    %1438 = vmatpush.msra.mxu0 %v552
    %1439 = vmatpush.msra.mxu0 %v548
    %1440 = vmatpush.msra.mxu0 %v544
    %1441 = vmatpush.msra.mxu0 %v540
    %1442 = vmatpush.msra.mxu0 %v536
    %1443 = vmatpush.msra.mxu0 %v532
    %1444 = vmatpush.msra.mxu0 %v528
    %1445 = vmatpush.msra.mxu0 %v524
    %1446 = vmatpush.msra.mxu0 %v520
    %1447 = vmatpush.msra.mxu0 %v516
    %1448 = vmatpush.msra.mxu0 %v512
    %1449 = vmatpush.msra.mxu0 %v508
    %1450 = vmatpush.msra.mxu0 %v504
    %1451 = vmatpush.msra.mxu0 %v500
    %1452 = vmatpush.msra.mxu0 %v496
    %1453 = vmatmul.f32.gmra.mxu0 %v1362
    %v1454 = vpop.f32.mrf.mxu0
    %v1455 = vadd.f32 0.0, %v1454
    %1456 = vmatmul.f32.gmra.mxu0 %v1363
    %v1457 = vpop.f32.mrf.mxu0
    %v1458 = vadd.f32 0.0, %v1457
    %1459 = vdwg.mxu0
    %1460 = vmatpush.msra.mxu0 %v557
    %1461 = vmatpush.msra.mxu0 %v553
    %1462 = vmatpush.msra.mxu0 %v549
    %1463 = vmatpush.msra.mxu0 %v545
    %1464 = vmatpush.msra.mxu0 %v541
    %1465 = vmatpush.msra.mxu0 %v537
    %1466 = vmatpush.msra.mxu0 %v533
    %1467 = vmatpush.msra.mxu0 %v529
    %1468 = vmatpush.msra.mxu0 %v525
    %1469 = vmatpush.msra.mxu0 %v521
    %1470 = vmatpush.msra.mxu0 %v517
    %1471 = vmatpush.msra.mxu0 %v513
    %1472 = vmatpush.msra.mxu0 %v509
    %1473 = vmatpush.msra.mxu0 %v505
    %1474 = vmatpush.msra.mxu0 %v501
    %1475 = vmatpush.msra.mxu0 %v497
    %1476 = vmatmul.f32.gmra.mxu0 %v1362
    %v1477 = vpop.f32.mrf.mxu0
    %v1478 = vadd.f32 0.0, %v1477
    %1479 = vmatmul.f32.gmra.mxu0 %v1363
    %v1480 = vpop.f32.mrf.mxu0
    %v1481 = vadd.f32 0.0, %v1480
    %1482 = vdwg.mxu0
    %v1483 = vadd.f32 %v1383, %v1409
    %v1484 = vadd.f32 %v1384, %v1432
    %v1485 = vadd.f32 %v1385, %v1455
    %v1486 = vadd.f32 %v1386, %v1478
    %v1487 = vadd.f32 %v1387, %v1412
    %v1488 = vadd.f32 %v1388, %v1435
    %v1489 = vadd.f32 %v1389, %v1458
    %v1490 = vadd.f32 %v1390, %v1481
    %v1491 = vmul.f32 %v1483, 0.5
    %v1492 = vmul.f32 %v1487, 0.5
    %v1493 = vtanh.pop %v1491
    %v1494 = vtanh.pop %v1492
    %v1495 = vadd.f32 %v1493, 1.0
    %v1496 = vadd.f32 %v1494, 1.0
    %v1497 = vmul.f32 %v1495, 0.5
    %v1498 = vmul.f32 %v1496, 0.5
    %v1499 = vmul.f32 %v1484, 0.5
    %v1500 = vmul.f32 %v1488, 0.5
    %v1501 = vtanh.pop %v1499
    %v1502 = vtanh.pop %v1500
    %v1503 = vadd.f32 %v1501, 1.0
    %v1504 = vadd.f32 %v1502, 1.0
    %v1505 = vmul.f32 %v1503, 0.5
    %v1506 = vmul.f32 %v1504, 0.5
    %v1507 = vtanh.pop %v1485
    %v1508 = vtanh.pop %v1489
    %v1509 = vmul.f32 %v1486, 0.5
    %v1510 = vmul.f32 %v1490, 0.5
    %v1511 = vtanh.pop %v1509
    %v1512 = vtanh.pop %v1510
    %v1513 = vadd.f32 %v1511, 1.0
    %v1514 = vadd.f32 %v1512, 1.0
    %v1515 = vmul.f32 %v1513, 0.5
    %v1516 = vmul.f32 %v1514, 0.5
    %v1517 = vmul.f32 %v1505, %v1358
    %v1518 = vmul.f32 %v1506, %v1359
    %v1519 = vmul.f32 %v1497, %v1507
    %v1520 = vmul.f32 %v1498, %v1508
    %v1521 = vadd.f32 %v1517, %v1519
    %v1522 = vadd.f32 %v1518, %v1520
    %v1523 = vtanh.pop %v1521
    %v1524 = vtanh.pop %v1522
    %v1525 = vmul.f32 %v1515, %v1523
    %v1526 = vmul.f32 %v1516, %v1524
    %s1527 = sadd.s32 %s558, 6
    %v1528 = vstv %s1527
    %vm1529 = vcmp.eq.s32.totalorder %v492, %v1528
    %vm1530 = vcmp.eq.s32.totalorder %v493, %v1528
    %v1531 = vsel %vm1529, 1, 0
    %v1532 = vsel %vm1530, 1, 0
    %1533 = vset.pattern.permute.xlu0 0
    %1534 = vperm.xlu0 %1533, %v1531
    %v1535 = vpop.permute.xlu0 %1534
    %1536 = vset.pattern.permute.xlu0 0
    %1537 = vperm.xlu0 %1536, %v1532
    %v1538 = vpop.permute.xlu0 %1537
    %vm1539 = vcmp.eq.s32.totalorder %v1535, 1
    %vm1540 = vcmp.eq.s32.totalorder %v1538, 1
    %v1541 = vsel %vm1539, %v1525, %v1378
    %v1542 = vsel %vm1540, %v1526, %v1379
    %s1543 = smul.u32 12, 4
    %s1544 = smul.addr %s1543, 8
    %s1545 = scalar_lea.vmem [#allocation2], %s1544
    %v1546 = vld [vmem:[%s1545] sm:$0xff]
    %v1547 = vld [vmem:[%s1545 + $0x8] sm:$0xff]
    %v1548 = vld [vmem:[%s1545 + $0x10] sm:$0xff]
    %v1549 = vld [vmem:[%s1545 + $0x18] sm:$0xff]
    %v1550 = vld [vmem:[%s1545 + $0x20] sm:$0xff]
    %v1551 = vld [vmem:[%s1545 + $0x28] sm:$0xff]
    %v1552 = vld [vmem:[%s1545 + $0x30] sm:$0xff]
    %v1553 = vld [vmem:[%s1545 + $0x38] sm:$0xff]
    %1554 = vmatpush.msra.mxu0 %v554
    %1555 = vmatpush.msra.mxu0 %v550
    %1556 = vmatpush.msra.mxu0 %v546
    %1557 = vmatpush.msra.mxu0 %v542
    %1558 = vmatpush.msra.mxu0 %v538
    %1559 = vmatpush.msra.mxu0 %v534
    %1560 = vmatpush.msra.mxu0 %v530
    %1561 = vmatpush.msra.mxu0 %v526
    %1562 = vmatpush.msra.mxu0 %v522
    %1563 = vmatpush.msra.mxu0 %v518
    %1564 = vmatpush.msra.mxu0 %v514
    %1565 = vmatpush.msra.mxu0 %v510
    %1566 = vmatpush.msra.mxu0 %v506
    %1567 = vmatpush.msra.mxu0 %v502
    %1568 = vmatpush.msra.mxu0 %v498
    %1569 = vmatpush.msra.mxu0 %v494
    %1570 = vmatmul.f32.gmra.mxu0 %v1525
    %v1571 = vpop.f32.mrf.mxu0
    %v1572 = vadd.f32 0.0, %v1571
    %1573 = vmatmul.f32.gmra.mxu0 %v1526
    %v1574 = vpop.f32.mrf.mxu0
    %v1575 = vadd.f32 0.0, %v1574
    %1576 = vdwg.mxu0
    %1577 = vmatpush.msra.mxu0 %v555
    %1578 = vmatpush.msra.mxu0 %v551
    %1579 = vmatpush.msra.mxu0 %v547
    %1580 = vmatpush.msra.mxu0 %v543
    %1581 = vmatpush.msra.mxu0 %v539
    %1582 = vmatpush.msra.mxu0 %v535
    %1583 = vmatpush.msra.mxu0 %v531
    %1584 = vmatpush.msra.mxu0 %v527
    %1585 = vmatpush.msra.mxu0 %v523
    %1586 = vmatpush.msra.mxu0 %v519
    %1587 = vmatpush.msra.mxu0 %v515
    %1588 = vmatpush.msra.mxu0 %v511
    %1589 = vmatpush.msra.mxu0 %v507
    %1590 = vmatpush.msra.mxu0 %v503
    %1591 = vmatpush.msra.mxu0 %v499
    %1592 = vmatpush.msra.mxu0 %v495
    %1593 = vmatmul.f32.gmra.mxu0 %v1525
    %v1594 = vpop.f32.mrf.mxu0
    %v1595 = vadd.f32 0.0, %v1594
    %1596 = vmatmul.f32.gmra.mxu0 %v1526
    %v1597 = vpop.f32.mrf.mxu0
    %v1598 = vadd.f32 0.0, %v1597
    %1599 = vdwg.mxu0
    %1600 = vmatpush.msra.mxu0 %v556
    %1601 = vmatpush.msra.mxu0 %v552
    %1602 = vmatpush.msra.mxu0 %v548
    %1603 = vmatpush.msra.mxu0 %v544
    %1604 = vmatpush.msra.mxu0 %v540
    %1605 = vmatpush.msra.mxu0 %v536
    %1606 = vmatpush.msra.mxu0 %v532
    %1607 = vmatpush.msra.mxu0 %v528
    %1608 = vmatpush.msra.mxu0 %v524
    %1609 = vmatpush.msra.mxu0 %v520
    %1610 = vmatpush.msra.mxu0 %v516
    %1611 = vmatpush.msra.mxu0 %v512
    %1612 = vmatpush.msra.mxu0 %v508
    %1613 = vmatpush.msra.mxu0 %v504
    %1614 = vmatpush.msra.mxu0 %v500
    %1615 = vmatpush.msra.mxu0 %v496
    %1616 = vmatmul.f32.gmra.mxu0 %v1525
    %v1617 = vpop.f32.mrf.mxu0
    %v1618 = vadd.f32 0.0, %v1617
    %1619 = vmatmul.f32.gmra.mxu0 %v1526
    %v1620 = vpop.f32.mrf.mxu0
    %v1621 = vadd.f32 0.0, %v1620
    %1622 = vdwg.mxu0
    %1623 = vmatpush.msra.mxu0 %v557
    %1624 = vmatpush.msra.mxu0 %v553
    %1625 = vmatpush.msra.mxu0 %v549
    %1626 = vmatpush.msra.mxu0 %v545
    %1627 = vmatpush.msra.mxu0 %v541
    %1628 = vmatpush.msra.mxu0 %v537
    %1629 = vmatpush.msra.mxu0 %v533
    %1630 = vmatpush.msra.mxu0 %v529
    %1631 = vmatpush.msra.mxu0 %v525
    %1632 = vmatpush.msra.mxu0 %v521
    %1633 = vmatpush.msra.mxu0 %v517
    %1634 = vmatpush.msra.mxu0 %v513
    %1635 = vmatpush.msra.mxu0 %v509
    %1636 = vmatpush.msra.mxu0 %v505
    %1637 = vmatpush.msra.mxu0 %v501
    %1638 = vmatpush.msra.mxu0 %v497
    %1639 = vmatmul.f32.gmra.mxu0 %v1525
    %v1640 = vpop.f32.mrf.mxu0
    %v1641 = vadd.f32 0.0, %v1640
    %1642 = vmatmul.f32.gmra.mxu0 %v1526
    %v1643 = vpop.f32.mrf.mxu0
    %v1644 = vadd.f32 0.0, %v1643
    %1645 = vdwg.mxu0
    %v1646 = vadd.f32 %v1546, %v1572
    %v1647 = vadd.f32 %v1547, %v1595
    %v1648 = vadd.f32 %v1548, %v1618
    %v1649 = vadd.f32 %v1549, %v1641
    %v1650 = vadd.f32 %v1550, %v1575
    %v1651 = vadd.f32 %v1551, %v1598
    %v1652 = vadd.f32 %v1552, %v1621
    %v1653 = vadd.f32 %v1553, %v1644
    %v1654 = vmul.f32 %v1646, 0.5
    %v1655 = vmul.f32 %v1650, 0.5
    %v1656 = vtanh.pop %v1654
    %v1657 = vtanh.pop %v1655
    %v1658 = vadd.f32 %v1656, 1.0
    %v1659 = vadd.f32 %v1657, 1.0
    %v1660 = vmul.f32 %v1658, 0.5
    %v1661 = vmul.f32 %v1659, 0.5
    %v1662 = vmul.f32 %v1647, 0.5
    %v1663 = vmul.f32 %v1651, 0.5
    %v1664 = vtanh.pop %v1662
    %v1665 = vtanh.pop %v1663
    %v1666 = vadd.f32 %v1664, 1.0
    %v1667 = vadd.f32 %v1665, 1.0
    %v1668 = vmul.f32 %v1666, 0.5
    %v1669 = vmul.f32 %v1667, 0.5
    %v1670 = vtanh.pop %v1648
    %v1671 = vtanh.pop %v1652
    %v1672 = vmul.f32 %v1649, 0.5
    %v1673 = vmul.f32 %v1653, 0.5
    %v1674 = vtanh.pop %v1672
    %v1675 = vtanh.pop %v1673
    %v1676 = vadd.f32 %v1674, 1.0
    %v1677 = vadd.f32 %v1675, 1.0
    %v1678 = vmul.f32 %v1676, 0.5
    %v1679 = vmul.f32 %v1677, 0.5
    %v1680 = vmul.f32 %v1668, %v1521
    %v1681 = vmul.f32 %v1669, %v1522
    %v1682 = vmul.f32 %v1660, %v1670
    %v1683 = vmul.f32 %v1661, %v1671
    %v1684 = vadd.f32 %v1680, %v1682
    %v1685 = vadd.f32 %v1681, %v1683
    %v1686 = vtanh.pop %v1684
    %v1687 = vtanh.pop %v1685
    %v1688 = vmul.f32 %v1678, %v1686
    %v1689 = vmul.f32 %v1679, %v1687
    %s1690 = sadd.s32 %s558, 7
    %v1691 = vstv %s1690
    %vm1692 = vcmp.eq.s32.totalorder %v492, %v1691
    %vm1693 = vcmp.eq.s32.totalorder %v493, %v1691
    %v1694 = vsel %vm1692, 1, 0
    %v1695 = vsel %vm1693, 1, 0
    %1696 = vset.pattern.permute.xlu0 0
    %1697 = vperm.xlu0 %1696, %v1694
    %v1698 = vpop.permute.xlu0 %1697
    %1699 = vset.pattern.permute.xlu0 0
    %1700 = vperm.xlu0 %1699, %v1695
    %v1701 = vpop.permute.xlu0 %1700
    %vm1702 = vcmp.eq.s32.totalorder %v1698, 1
    %vm1703 = vcmp.eq.s32.totalorder %v1701, 1
    %v1704 = vsel %vm1702, %v1688, %v1541
    %v1705 = vsel %vm1703, %v1689, %v1542
    %s1706 = smul.u32 14, 4
    %s1707 = smul.addr %s1706, 8
    %s1708 = scalar_lea.vmem [#allocation2], %s1707
    %v1709 = vld [vmem:[%s1708] sm:$0xff]
    %v1710 = vld [vmem:[%s1708 + $0x8] sm:$0xff]
    %v1711 = vld [vmem:[%s1708 + $0x10] sm:$0xff]
    %v1712 = vld [vmem:[%s1708 + $0x18] sm:$0xff]
    %v1713 = vld [vmem:[%s1708 + $0x20] sm:$0xff]
    %v1714 = vld [vmem:[%s1708 + $0x28] sm:$0xff]
    %v1715 = vld [vmem:[%s1708 + $0x30] sm:$0xff]
    %v1716 = vld [vmem:[%s1708 + $0x38] sm:$0xff]
    %1717 = vmatpush.msra.mxu0 %v554
    %1718 = vmatpush.msra.mxu0 %v550
    %1719 = vmatpush.msra.mxu0 %v546
    %1720 = vmatpush.msra.mxu0 %v542
    %1721 = vmatpush.msra.mxu0 %v538
    %1722 = vmatpush.msra.mxu0 %v534
    %1723 = vmatpush.msra.mxu0 %v530
    %1724 = vmatpush.msra.mxu0 %v526
    %1725 = vmatpush.msra.mxu0 %v522
    %1726 = vmatpush.msra.mxu0 %v518
    %1727 = vmatpush.msra.mxu0 %v514
    %1728 = vmatpush.msra.mxu0 %v510
    %1729 = vmatpush.msra.mxu0 %v506
    %1730 = vmatpush.msra.mxu0 %v502
    %1731 = vmatpush.msra.mxu0 %v498
    %1732 = vmatpush.msra.mxu0 %v494
    %1733 = vmatmul.f32.gmra.mxu0 %v1688
    %v1734 = vpop.f32.mrf.mxu0
    %v1735 = vadd.f32 0.0, %v1734
    %1736 = vmatmul.f32.gmra.mxu0 %v1689
    %v1737 = vpop.f32.mrf.mxu0
    %v1738 = vadd.f32 0.0, %v1737
    %1739 = vdwg.mxu0
    %1740 = vmatpush.msra.mxu0 %v555
    %1741 = vmatpush.msra.mxu0 %v551
    %1742 = vmatpush.msra.mxu0 %v547
    %1743 = vmatpush.msra.mxu0 %v543
    %1744 = vmatpush.msra.mxu0 %v539
    %1745 = vmatpush.msra.mxu0 %v535
    %1746 = vmatpush.msra.mxu0 %v531
    %1747 = vmatpush.msra.mxu0 %v527
    %1748 = vmatpush.msra.mxu0 %v523
    %1749 = vmatpush.msra.mxu0 %v519
    %1750 = vmatpush.msra.mxu0 %v515
    %1751 = vmatpush.msra.mxu0 %v511
    %1752 = vmatpush.msra.mxu0 %v507
    %1753 = vmatpush.msra.mxu0 %v503
    %1754 = vmatpush.msra.mxu0 %v499
    %1755 = vmatpush.msra.mxu0 %v495
    %1756 = vmatmul.f32.gmra.mxu0 %v1688
    %v1757 = vpop.f32.mrf.mxu0
    %v1758 = vadd.f32 0.0, %v1757
    %1759 = vmatmul.f32.gmra.mxu0 %v1689
    %v1760 = vpop.f32.mrf.mxu0
    %v1761 = vadd.f32 0.0, %v1760
    %1762 = vdwg.mxu0
    %1763 = vmatpush.msra.mxu0 %v556
    %1764 = vmatpush.msra.mxu0 %v552
    %1765 = vmatpush.msra.mxu0 %v548
    %1766 = vmatpush.msra.mxu0 %v544
    %1767 = vmatpush.msra.mxu0 %v540
    %1768 = vmatpush.msra.mxu0 %v536
    %1769 = vmatpush.msra.mxu0 %v532
    %1770 = vmatpush.msra.mxu0 %v528
    %1771 = vmatpush.msra.mxu0 %v524
    %1772 = vmatpush.msra.mxu0 %v520
    %1773 = vmatpush.msra.mxu0 %v516
    %1774 = vmatpush.msra.mxu0 %v512
    %1775 = vmatpush.msra.mxu0 %v508
    %1776 = vmatpush.msra.mxu0 %v504
    %1777 = vmatpush.msra.mxu0 %v500
    %1778 = vmatpush.msra.mxu0 %v496
    %1779 = vmatmul.f32.gmra.mxu0 %v1688
    %v1780 = vpop.f32.mrf.mxu0
    %v1781 = vadd.f32 0.0, %v1780
    %1782 = vmatmul.f32.gmra.mxu0 %v1689
    %v1783 = vpop.f32.mrf.mxu0
    %v1784 = vadd.f32 0.0, %v1783
    %1785 = vdwg.mxu0
    %1786 = vmatpush.msra.mxu0 %v557
    %1787 = vmatpush.msra.mxu0 %v553
    %1788 = vmatpush.msra.mxu0 %v549
    %1789 = vmatpush.msra.mxu0 %v545
    %1790 = vmatpush.msra.mxu0 %v541
    %1791 = vmatpush.msra.mxu0 %v537
    %1792 = vmatpush.msra.mxu0 %v533
    %1793 = vmatpush.msra.mxu0 %v529
    %1794 = vmatpush.msra.mxu0 %v525
    %1795 = vmatpush.msra.mxu0 %v521
    %1796 = vmatpush.msra.mxu0 %v517
    %1797 = vmatpush.msra.mxu0 %v513
    %1798 = vmatpush.msra.mxu0 %v509
    %1799 = vmatpush.msra.mxu0 %v505
    %1800 = vmatpush.msra.mxu0 %v501
    %1801 = vmatpush.msra.mxu0 %v497
    %1802 = vmatmul.f32.gmra.mxu0 %v1688
    %v1803 = vpop.f32.mrf.mxu0
    %v1804 = vadd.f32 0.0, %v1803
    %1805 = vmatmul.f32.gmra.mxu0 %v1689
    %v1806 = vpop.f32.mrf.mxu0
    %v1807 = vadd.f32 0.0, %v1806
    %1808 = vdwg.mxu0
    %v1809 = vadd.f32 %v1709, %v1735
    %v1810 = vadd.f32 %v1710, %v1758
    %v1811 = vadd.f32 %v1711, %v1781
    %v1812 = vadd.f32 %v1712, %v1804
    %v1813 = vadd.f32 %v1713, %v1738
    %v1814 = vadd.f32 %v1714, %v1761
    %v1815 = vadd.f32 %v1715, %v1784
    %v1816 = vadd.f32 %v1716, %v1807
    %v1817 = vmul.f32 %v1809, 0.5
    %v1818 = vmul.f32 %v1813, 0.5
    %v1819 = vtanh.pop %v1817
    %v1820 = vtanh.pop %v1818
    %v1821 = vadd.f32 %v1819, 1.0
    %v1822 = vadd.f32 %v1820, 1.0
    %v1823 = vmul.f32 %v1821, 0.5
    %v1824 = vmul.f32 %v1822, 0.5
    %v1825 = vmul.f32 %v1810, 0.5
    %v1826 = vmul.f32 %v1814, 0.5
    %v1827 = vtanh.pop %v1825
    %v1828 = vtanh.pop %v1826
    %v1829 = vadd.f32 %v1827, 1.0
    %v1830 = vadd.f32 %v1828, 1.0
    %v1831 = vmul.f32 %v1829, 0.5
    %v1832 = vmul.f32 %v1830, 0.5
    %v1833 = vtanh.pop %v1811
    %v1834 = vtanh.pop %v1815
    %v1835 = vmul.f32 %v1812, 0.5
    %v1836 = vmul.f32 %v1816, 0.5
    %v1837 = vtanh.pop %v1835
    %v1838 = vtanh.pop %v1836
    %v1839 = vadd.f32 %v1837, 1.0
    %v1840 = vadd.f32 %v1838, 1.0
    %v1841 = vmul.f32 %v1839, 0.5
    %v1842 = vmul.f32 %v1840, 0.5
    %v1843 = vmul.f32 %v1831, %v1684
    %v1844 = vmul.f32 %v1832, %v1685
    %v1845 = vmul.f32 %v1823, %v1833
    %v1846 = vmul.f32 %v1824, %v1834
    %v1847 = vadd.f32 %v1843, %v1845
    %v1848 = vadd.f32 %v1844, %v1846
    %v1849 = vtanh.pop %v1847
    %v1850 = vtanh.pop %v1848
    %v1851 = vmul.f32 %v1841, %v1849
    %v1852 = vmul.f32 %v1842, %v1850
    %s1853 = sadd.s32 %s558, 8
    %v1854 = vstv %s1853
    %vm1855 = vcmp.eq.s32.totalorder %v492, %v1854
    %vm1856 = vcmp.eq.s32.totalorder %v493, %v1854
    %v1857 = vsel %vm1855, 1, 0
    %v1858 = vsel %vm1856, 1, 0
    %1859 = vset.pattern.permute.xlu0 0
    %1860 = vperm.xlu0 %1859, %v1857
    %v1861 = vpop.permute.xlu0 %1860
    %1862 = vset.pattern.permute.xlu0 0
    %1863 = vperm.xlu0 %1862, %v1858
    %v1864 = vpop.permute.xlu0 %1863
    %vm1865 = vcmp.eq.s32.totalorder %v1861, 1
    %vm1866 = vcmp.eq.s32.totalorder %v1864, 1
    %v1867 = vsel %vm1865, %v1851, %v1704
    %v1868 = vsel %vm1866, %v1852, %v1705
    %1869 = vst [vmem:[#allocation3] sm:$0xff] %v1851
    %1870 = vst [vmem:[#allocation3 + $0x8] sm:$0xff] %v1852
    %1871 = vst [vmem:[#allocation4] sm:$0xff] %v1847
    %1872 = vst [vmem:[#allocation4 + $0x8] sm:$0xff] %v1848
    %1873 = vst [vmem:[#allocation11] sm:$0xff] %v1867
    %1874 = vst [vmem:[#allocation11 + $0x8] sm:$0xff] %v1868
    // Predicated region
    $region38: #{tpu_custom_call.1} parent=1 // pred_check
      _
    $region39: #{tpu_custom_call.1} parent=1 // pred_check_branch
      %1876 = sbr.rel (0) target = $region41
    $region40: #{tpu_custom_call.1} parent=1 // pred_region
      %1878 = vsyncadd [#allocation7], 0
      %s1879 = sshll.u32 [#allocation11], 4
      %s1880 = int_to_ptr.vmem [resolvable:$true] %s1879
      %s1881 = sshll.u32 %s5, 4
      %s1882 = int_to_ptr.hbm [resolvable:$true] %s1881
      %1887 = dma.vmem_to_hbm [thread:$0]  %s1880, 256, %s1882, [#allocation7], 128, 128, 8
    $region41: #{tpu_custom_call.1} parent=1 // pred_fallthru
      _
    // Predicated region
    $region42: #{tpu_custom_call.1} parent=1 // pred_check
      _
    $region43: #{tpu_custom_call.1} parent=1 // pred_check_branch
      %1889 = sbr.rel (0) target = $region45
    $region44: #{tpu_custom_call.1} parent=1 // pred_region
      %1891 = dma.done [#allocation7], 256
    $region45: #{tpu_custom_call.1} parent=1 // pred_fallthru
      _
    %1892 = vsyncpa [#allocation6], 1
    %1893 = vsyncpa [#allocation9], 1
    %1894 = vsyncpa [#allocation7], 1

</llo_original>
